<compile_context>
chip_gen: v7x
topology: tpu7x:2x2x1
jax: 0.10.0
libtpu: 0.0.40
codegen_flags: <defaults>
</compile_context>

<pallas_src>
import functools
import re

import jax
import jax.numpy as jnp
from jax.experimental import pallas as pl
from jax.experimental.pallas import tpu as pltpu


def _round_up(x, m):
    return (x + m - 1) // m * m


def _cdiv(a, b):
    return -(-a // b)


# ---------------------------------------------------------------------------
# Chip introspection
# ---------------------------------------------------------------------------
def _tpu_generation():
    """Best-effort TPU generation number from device_kind (e.g. 5, 6, 7)."""
    try:
        kind = (jax.devices()[0].device_kind or "").lower()
    except Exception:
        return None
    m = re.search(r"(\d+)", kind)
    return int(m.group(1)) if m else None


def _tpu_vmem_capacity(gen):
    try:
        return int(pltpu.get_tpu_info().vmem_capacity_bytes)
    except Exception:
        # Conservative fallback: v7x has 64 MiB per TensorCore, v5e/v6e 128 MiB.
        return (64 << 20) if (gen is None or gen >= 7) else (128 << 20)


def auto_gate_dtype(gen=None):
    """bf16 gate transcendentals on v6e/v7x (bf16 EUP); f32 on v5e and older."""
    gen = _tpu_generation() if gen is None else gen
    return jnp.bfloat16 if (gen is not None and gen >= 6) else jnp.float32


# ---------------------------------------------------------------------------
# Kernel
# ---------------------------------------------------------------------------
def nary_tree_lstm_kernel(act_ref, c_ref, w_ref, b_ref, out_ref, acc_ref, *,
                          hp, n_ary, gate_dtype):
    """Fused N-ary TreeLSTM cell update for one (row tile, K chunk) grid point.

    act_ref: (TB, TK)          bf16  K-chunk of [x | h_child_0 .. h_child_{N-1}]
    c_ref:   (TB, N*Hp)        f32   child cell states (each child lane padded)
    w_ref:   (TK, (3+N)*Hp)    bf16  K-chunk of stacked [ioux|iouh ; fx-rep|fh]
    b_ref:   (1,  (3+N)*Hp)    f32   stacked [b_iouh | b_fh]
    out_ref: (TB, 2*Hp)        f32   [h | c] fused output slab
    acc_ref: (TB, (3+N)*Hp)    f32   pre-activation accumulator (scratch)

    Grid = (row tiles "parallel", K chunks "arbitrary").  With a resident
    weight the K axis has a single step and init + finalize fire together.
    """
    k = pl.program_id(1)

    @pl.when(k == 0)
    def _init():
        acc_ref[...] = jnp.zeros_like(acc_ref)

    # One MXU GEMM per K chunk (bf16 in, f32 accumulate).
    acc_ref[...] += jnp.dot(act_ref[...], w_ref[...],
                            preferred_element_type=jnp.float32)

    @pl.when(k == pl.num_programs(1) - 1)
    def _finalize():
        z = acc_ref[...] + b_ref[...]

        def tanh_(v):
            # EUP tanh; bf16-packed on v6e/v7x (~2x transcendental throughput).
            return jnp.tanh(v.astype(gate_dtype)).astype(jnp.float32)

        def sigmoid_(v):
            # Logistic via the tanh identity: one EUP push instead of exp+recip.
            return 0.5 * tanh_(0.5 * v) + 0.5

        # All slices below are 128-lane aligned (hp is a multiple of 128).
        i = sigmoid_(z[:, 0 * hp:1 * hp])
        o = sigmoid_(z[:, 1 * hp:2 * hp])
        u = tanh_(z[:, 2 * hp:3 * hp])
        f = sigmoid_(z[:, 3 * hp:])            # (TB, N*Hp)

        fc = f * c_ref[...]
        fc_sum = fc[:, 0:hp]
        for n in range(1, n_ary):              # static unroll, whole-vreg slices
            fc_sum = fc_sum + fc[:, n * hp:(n + 1) * hp]

        c_new = i * u + fc_sum
        h_new = o * tanh_(c_new)

        out_ref[:, 0:hp] = h_new.astype(out_ref.dtype)
        out_ref[:, hp:] = c_new.astype(out_ref.dtype)


# ---------------------------------------------------------------------------
# Parameters
# ---------------------------------------------------------------------------
def init_params(key, embedding_size, hidden_size, N):
    """Deterministic synthetic parameters (nn.Linear shapes, stored transposed)."""
    ks = jax.random.split(key, 6)
    s = 0.1
    return {
        # ioux: Linear(E, 3H, bias=False)  -> (E, 3H)
        "w_ioux": s * jax.random.normal(ks[0], (embedding_size, 3 * hidden_size), jnp.float32),
        # iouh: Linear(N*H, 3H)            -> (N*H, 3H), bias (1, 3H)
        "w_iouh": s * jax.random.normal(ks[1], (N * hidden_size, 3 * hidden_size), jnp.float32),
        "b_iouh": s * jax.random.normal(ks[2], (1, 3 * hidden_size), jnp.float32),
        # fx: Linear(E, H, bias=False)     -> (E, H)
        "w_fx": s * jax.random.normal(ks[3], (embedding_size, hidden_size), jnp.float32),
        # fh: Linear(N*H, N*H)             -> (N*H, N*H), bias (1, N*H)
        "w_fh": s * jax.random.normal(ks[4], (N * hidden_size, N * hidden_size), jnp.float32),
        "b_fh": s * jax.random.normal(ks[5], (1, N * hidden_size), jnp.float32),
    }


def stack_params(params, *, embedding_size, hidden_size, N):
    """Fuse the four linears into one lane-padded weight matrix (done once).

    Row layout (K axis):   [ x (E) | child_0 hidden (Hp) | ... | child_{N-1} (Hp) | pad ]
    Column layout (out):   [ i (Hp) | o (Hp) | u (Hp) | f_0 (Hp) | ... | f_{N-1} (Hp) ]
    Only the first H lanes of each Hp block are "real"; the rest are zero.
    """
    E, H = embedding_size, hidden_size
    Hp = _round_up(H, 128)
    Kp = _round_up(E + N * Hp, 128)
    ncols = (3 + N) * Hp

    w = jnp.zeros((Kp, ncols), jnp.float32)
    b = jnp.zeros((1, ncols), jnp.float32)

    w_ioux, w_iouh = params["w_ioux"], params["w_iouh"]
    w_fx, w_fh = params["w_fx"], params["w_fh"]

    # x rows -> i/o/u and every child's f block (this is fx(x).repeat(1, N)).
    for g in range(3):
        w = w.at[:E, g * Hp:g * Hp + H].set(w_ioux[:, g * H:(g + 1) * H])
    for n in range(N):
        w = w.at[:E, (3 + n) * Hp:(3 + n) * Hp + H].set(w_fx)

    # child-m hidden rows -> i/o/u and every child-n f block.
    for m in range(N):
        r0 = E + m * Hp
        src = slice(m * H, (m + 1) * H)
        for g in range(3):
            w = w.at[r0:r0 + H, g * Hp:g * Hp + H].set(w_iouh[src, g * H:(g + 1) * H])
        for n in range(N):
            w = w.at[r0:r0 + H, (3 + n) * Hp:(3 + n) * Hp + H].set(
                w_fh[src, n * H:(n + 1) * H])

    for g in range(3):
        b = b.at[:, g * Hp:g * Hp + H].set(params["b_iouh"][:, g * H:(g + 1) * H])
    for n in range(N):
        b = b.at[:, (3 + n) * Hp:(3 + n) * Hp + H].set(
            params["b_fh"][:, n * H:(n + 1) * H])

    return {"w_cat": w.astype(jnp.bfloat16), "b_cat": b}


# ---------------------------------------------------------------------------
# Tiling / VMEM planning
# ---------------------------------------------------------------------------
def _choose_row_tile(batch, cap, prefer_even_tiles):
    """Balanced row tile: minimizes last-tile padding; even tile count on v7x."""
    batch = max(int(batch), 1)
    n_tiles = _cdiv(batch, cap)
    if prefer_even_tiles and batch >= 64:
        # v7x has 2 TensorCores; keep the "parallel" row axis balanced.
        n_tiles += n_tiles % 2
    return _round_up(_cdiv(batch, n_tiles), 8)


def _vmem_need(tb, tk, ncols, n_ary, hp, w_bufs):
    """Bytes of VMEM with the real buffer counts used by the pipeline."""
    return (tk * ncols * 2 * w_bufs          # stacked weight (bf16)
            + ncols * 4                      # bias (f32, single buffer)
            + 2 * tb * tk * 2                # act tile (bf16, double buffered)
            + 2 * tb * n_ary * hp * 4        # child cell tile (f32, x2)
            + 2 * tb * 2 * hp * 4            # [h|c] out tile (f32, x2)
            + tb * ncols * 4)                # pre-activation accumulator scratch


def _choose_k_tile(Kp, tb, ncols, n_ary, hp, budget):
    """Full-resident weight if it fits; otherwise stream 128-multiple K chunks."""
    if _vmem_need(tb, Kp, ncols, n_ary, hp, w_bufs=1) <= budget:
        return Kp
    tk = max(128, _round_up(Kp // 2, 128))
    while tk > 128 and _vmem_need(tb, tk, ncols, n_ary, hp, w_bufs=2) > budget:
        tk = max(128, _round_up(tk // 2, 128))
    return tk


# ---------------------------------------------------------------------------
# Forward wrapper (mirrors NaryTreeLSTMCell.forward)
# ---------------------------------------------------------------------------
def nary_tree_lstm_forward(stacked, x, h, c, hx, tree_idx, hidden_idx, *,
                           N, embedding_size, hidden_size, gate_dtype=None):
    """x: (B, E); h, c: (len(hidden_idx), H); hx: pair of (1, H);
    tree_idx: (T=B*N,) (used only for its length, as in the module);
    hidden_idx: (K,) slots of real children among the T slots."""
    E, H = embedding_size, hidden_size
    Hp = _round_up(H, 128)
    Kp = stacked["w_cat"].shape[0]
    ncols = stacked["w_cat"].shape[1]

    T = tree_idx.shape[0]
    B = T // N
    h0, c0 = hx

    gen = _tpu_generation()
    vmem_phys = _tpu_vmem_capacity(gen)
    if gate_dtype is None:
        gate_dtype = auto_gate_dtype(gen)

    # VMEM budget: never ask for the whole physical VMEM (compiler needs
    # internal scratch). 64-MiB chips (v7x) -> 48 MiB cap; 128-MiB chips -> 100.
    vmem_cap = (48 << 20) if vmem_phys <= (64 << 20) else (100 << 20)
    budget = vmem_cap - (8 << 20)

    # ---- tiling plan: balanced row tiles + resident-or-streamed weight ----
    row_cap = 256 if vmem_phys <= (64 << 20) else 512
    TB = _choose_row_tile(B, row_cap, prefer_even_tiles=(gen is not None and gen >= 7))

    def plan(tb):
        tk = _choose_k_tile(Kp, tb, ncols, N, Hp, budget)
        ks = _cdiv(Kp, tk)
        return tk, ks, _vmem_need(tb, tk, ncols, N, Hp, w_bufs=(1 if ks == 1 else 2))

    TK, k_steps, need = plan(TB)
    while TB > 8 and need > budget:          # last resort: shrink the row tile
        TB = max(8, _round_up(TB // 2, 8))
        TK, k_steps, need = plan(TB)

    Bp = _round_up(B, TB)
    Kp_pad = k_steps * TK

    # Scoped limit: generous (computed for worst-case double-buffered weight),
    # but always below the generation cap.
    need_worst = _vmem_need(TB, TK, ncols, N, Hp, w_bufs=2)
    vmem_limit = int(min(vmem_cap, max(need_worst + (4 << 20), 16 << 20)))

    # ---- glue: replace_idx_ (tile default state, scatter real child states) ----
    # Structural (no Python branch on hidden_idx.size) so it is jit-safe with a
    # traced hidden_idx; an empty index array scatters nothing.
    h_slots = jnp.zeros((Bp * N, Hp), jnp.float32).at[:T, :H].set(jnp.tile(h0, (T, 1)))
    c_slots = jnp.zeros((Bp * N, Hp), jnp.float32).at[:T, :H].set(jnp.tile(c0, (T, 1)))
    h_slots = h_slots.at[hidden_idx, :H].set(h)
    c_slots = c_slots.at[hidden_idx, :H].set(c)
    hcat = h_slots.reshape(Bp, N * Hp)       # (Bp, N*Hp), lane-padded per child
    ccat = c_slots.reshape(Bp, N * Hp)

    # Fused activation [x | h_children] in bf16 for the MXU.
    act = jnp.zeros((Bp, Kp_pad), jnp.bfloat16)
    act = act.at[:B, :E].set(x.astype(jnp.bfloat16))
    act = act.at[:, E:E + N * Hp].set(hcat.astype(jnp.bfloat16))

    w_cat = stacked["w_cat"]
    if Kp_pad > Kp:                          # only in the streamed-weight case
        w_cat = jnp.pad(w_cat, ((0, Kp_pad - Kp), (0, 0)))
    b_cat = stacked["b_cat"]

    grid = (Bp // TB, k_steps)
    kernel = functools.partial(nary_tree_lstm_kernel, hp=Hp, n_ary=N,
                               gate_dtype=gate_dtype)

    def _bs(shape, imap, mode=None):
        if mode is None:
            return pl.BlockSpec(shape, imap)
        return pl.BlockSpec(shape, imap, pipeline_mode=mode)

    def run(single_buffer_const):
        # Constant-index operands (resident weight + bias) carry nothing to
        # double-buffer: single-buffer them to halve their VMEM footprint.
        w_mode = (pl.Buffered(1) if (single_buffer_const and k_steps == 1) else None)
        b_mode = (pl.Buffered(1) if single_buffer_const else None)
        return pl.pallas_call(
            kernel,
            out_shape=jax.ShapeDtypeStruct((Bp, 2 * Hp), jnp.float32),
            grid=grid,
            in_specs=[
                _bs((TB, TK), lambda i, k: (i, k)),              # act (K-chunked)
                _bs((TB, N * Hp), lambda i, k: (i, 0)),          # child cells
                _bs((TK, ncols), lambda i, k: (k, 0), w_mode),   # stacked weights
                _bs((1, ncols), lambda i, k: (0, 0), b_mode),    # stacked bias
            ],
            out_specs=pl.BlockSpec((TB, 2 * Hp), lambda i, k: (i, 0)),
            scratch_shapes=[pltpu.VMEM((TB, ncols), jnp.float32)],
            compiler_params=pltpu.CompilerParams(
                dimension_semantics=("parallel", "arbitrary"),
                vmem_limit_bytes=vmem_limit),
        )(act, ccat, w_cat, b_cat)

    try:
        out = run(single_buffer_const=True)
    except Exception:
        # TODO(synk): drop this fallback once pl.Buffered(1) on constant-index
        # operands is guaranteed by the minimum supported jax version.
        out = run(single_buffer_const=False)

    h_out = out[:B, :H]
    c_out = out[:B, Hp:Hp + H]
    return h_out, c_out


# ---------------------------------------------------------------------------
# Pure-JAX reference
# ---------------------------------------------------------------------------
def reference_forward(params, x, hcat, ccat, *, N, hidden_size):
    """Module semantics (un-fused, un-padded) for a correctness check."""
    H = hidden_size
    iou = x @ params["w_ioux"] + hcat @ params["w_iouh"] + params["b_iouh"]
    i = jax.nn.sigmoid(iou[:, :H])
    o = jax.nn.sigmoid(iou[:, H:2 * H])
    u = jnp.tanh(iou[:, 2 * H:3 * H])
    f = jax.nn.sigmoid(hcat @ params["w_fh"] + params["b_fh"]
                       + jnp.tile(x @ params["w_fx"], (1, N)))
    fc = f * ccat
    fc_sum = fc.reshape(-1, N, H).sum(axis=1)
    c_new = i * u + fc_sum
    h_new = o * jnp.tanh(c_new)
    return h_new, c_new


def _bf16_round(a):
    return a.astype(jnp.bfloat16).astype(jnp.float32)


if __name__ == "__main__":
    E = 32          # embedding_size
    H = 32          # hidden_size
    N = 2           # N-ary branching factor
    B = 4           # parent nodes this step
    T = B * N       # child slots = tree_idx.shape[0]

    key = jax.random.PRNGKey(0)
    k_p, k_x, k_h, k_c, k_hx = jax.random.split(key, 5)

    params = init_params(k_p, E, H, N)
    stacked = stack_params(params, embedding_size=E, hidden_size=H, N=N)

    x = jax.random.normal(k_x, (B, E), jnp.float32)
    hidden_idx = jnp.array([1, 3, 4, 6], dtype=jnp.int32)          # real child slots
    h = jax.random.normal(k_h, (hidden_idx.shape[0], H), jnp.float32)
    c = jax.random.normal(k_c, (hidden_idx.shape[0], H), jnp.float32)
    hx = (0.1 * jax.random.normal(k_hx, (1, H), jnp.float32),
          jnp.zeros((1, H), jnp.float32))
    tree_idx = jnp.arange(T, dtype=jnp.int32)

    gate_dtype = auto_gate_dtype()
    h_out, c_out = nary_tree_lstm_forward(
        stacked, x, h, c, hx, tree_idx, hidden_idx,
        N=N, embedding_size=E, hidden_size=H, gate_dtype=gate_dtype)
    jax.block_until_ready((h_out, c_out))

    f32_gates = jnp.dtype(gate_dtype) == jnp.dtype(jnp.float32)
    loose_atol = 5e-2 if f32_gates else 1e-1      # bf16 EUP gates add ~1e-2 error
    tight_atol = 2e-3 if f32_gates else 5e-2

    # --- correctness: module semantics in f32 (loose, bf16 matmul in kernel) ---
    h_full = jnp.tile(hx[0], (T, 1)).at[hidden_idx].set(h).reshape(-1, N * H)
    c_full = jnp.tile(hx[1], (T, 1)).at[hidden_idx].set(c).reshape(-1, N * H)
    h_ref, c_ref = reference_forward(params, x, h_full, c_full, N=N, hidden_size=H)
    assert jnp.allclose(h_out, h_ref, atol=loose_atol), "h mismatch (f32 reference)"
    assert jnp.allclose(c_out, c_ref, atol=loose_atol), "c mismatch (f32 reference)"

    # --- tighter check: same bf16 rounding as the kernel's matmul inputs ---
    params_r = {k: (_bf16_round(v) if k.startswith("w_") else v)
                for k, v in params.items()}
    h_ref2, c_ref2 = reference_forward(
        params_r, _bf16_round(x), _bf16_round(h_full), c_full, N=N, hidden_size=H)
    assert jnp.allclose(h_out, h_ref2, atol=tight_atol), "h mismatch (bf16-matched reference)"
    assert jnp.allclose(c_out, c_ref2, atol=tight_atol), "c mismatch (bf16-matched reference)"

    print("KERNEL_OK")
</pallas_src>

<mosaic_0001>
module attributes {stable_mosaic.version = 11 : i64} {
  func.func @nary_tree_lstm_kernel(%arg0: i32, %arg1: i32, %arg2: memref<8x384xbf16, #tpu.memory_space<vmem>>, %arg3: memref<8x256xf32, #tpu.memory_space<vmem>>, %arg4: memref<384x640xbf16, #tpu.memory_space<vmem>>, %arg5: memref<1x640xf32, #tpu.memory_space<vmem>>, %arg6: memref<8x256xf32, #tpu.memory_space<vmem>>, %arg7: memref<8x640xf32, #tpu.memory_space<vmem>>) attributes {dimension_semantics = [#tpu.dimension_semantics<parallel>, #tpu.dimension_semantics<arbitrary>], iteration_bounds = array<i64: 1, 1>, scalar_prefetch = 0 : i64, scratch_operands = 1 : i64, tpu.core_type = #tpu.core_type<tc>, window_params = [{transform_indices = @transform_0, window_bounds = array<i64: 8, 384>}, {transform_indices = @transform_1, window_bounds = array<i64: 8, 256>}, {pipeline_mode = #tpu.pipeline_mode<synchronous>, transform_indices = @transform_2, window_bounds = array<i64: 384, 640>}, {pipeline_mode = #tpu.pipeline_mode<synchronous>, transform_indices = @transform_3, window_bounds = array<i64: 1, 640>}, {transform_indices = @transform_4, window_bounds = array<i64: 8, 256>}]} {
    %c0_i32 = arith.constant 0 : i32
    %0 = arith.cmpi eq, %arg1, %c0_i32 : i32
    %1 = arith.extui %0 : i1 to i32
    %c0_i32_0 = arith.constant 0 : i32
    %2 = arith.cmpi ne, %1, %c0_i32_0 : i32
    scf.if %2 {
      %cst_10 = arith.constant 0.000000e+00 : f32
      %12 = vector.broadcast %cst_10 : f32 to vector<8x640xf32>
      %c0_11 = arith.constant 0 : index
      %c0_12 = arith.constant 0 : index
      %13 = vector.load %arg7[%c0_11, %c0_12] : memref<8x640xf32, #tpu.memory_space<vmem>>, vector<8x640xf32>
      tpu.vector_store %arg7[%c0_11, %c0_12], %12 {strides = array<i32>} : memref<8x640xf32, #tpu.memory_space<vmem>>, vector<8x640xf32>,
    } else {
    }
    %c0 = arith.constant 0 : index
    %c0_1 = arith.constant 0 : index
    %3 = vector.load %arg7[%c0, %c0_1] : memref<8x640xf32, #tpu.memory_space<vmem>>, vector<8x640xf32>
    %c0_2 = arith.constant 0 : index
    %c0_3 = arith.constant 0 : index
    %4 = vector.load %arg2[%c0_2, %c0_3] : memref<8x384xbf16, #tpu.memory_space<vmem>>, vector<8x384xbf16>
    %c0_4 = arith.constant 0 : index
    %c0_5 = arith.constant 0 : index
    %5 = vector.load %arg4[%c0_4, %c0_5] : memref<384x640xbf16, #tpu.memory_space<vmem>>, vector<384x640xbf16>
    %cst = arith.constant dense<0.000000e+00> : vector<8x640xf32>
    %6 = tpu.matmul %4, %5, %cst {dimension_numbers = #tpu.dot_dimension_numbers<[1], [0], [0], [1], [0, 0, 1, 1], [], []>} : vector<8x384xbf16>, vector<384x640xbf16>, vector<8x640xf32> -> vector<8x640xf32>
    %7 = arith.addf %3, %6 : vector<8x640xf32>
    %c0_6 = arith.constant 0 : index
    %c0_7 = arith.constant 0 : index
    %8 = vector.load %arg7[%c0_6, %c0_7] : memref<8x640xf32, #tpu.memory_space<vmem>>, vector<8x640xf32>
    tpu.vector_store %arg7[%c0_6, %c0_7], %7 {strides = array<i32>} : memref<8x640xf32, #tpu.memory_space<vmem>>, vector<8x640xf32>,
    %c0_i32_8 = arith.constant 0 : i32
    %9 = arith.cmpi eq, %arg1, %c0_i32_8 : i32
    %10 = arith.extui %9 : i1 to i32
    %c0_i32_9 = arith.constant 0 : i32
    %11 = arith.cmpi ne, %10, %c0_i32_9 : i32
    scf.if %11 {
      %c0_10 = arith.constant 0 : index
      %c0_11 = arith.constant 0 : index
      %12 = vector.load %arg7[%c0_10, %c0_11] : memref<8x640xf32, #tpu.memory_space<vmem>>, vector<8x640xf32>
      %c0_12 = arith.constant 0 : index
      %c0_13 = arith.constant 0 : index
      %13 = vector.load %arg5[%c0_12, %c0_13] : memref<1x640xf32, #tpu.memory_space<vmem>>, vector<1x640xf32>
      %14 = vector.broadcast %13 : vector<1x640xf32> to vector<8x640xf32>
      %15 = arith.addf %12, %14 : vector<8x640xf32>
      %16 = vector.extract_strided_slice %15 {offsets = [0, 0], sizes = [8, 128], strides = [1, 1]} : vector<8x640xf32> to vector<8x128xf32>
      %cst_14 = arith.constant 5.000000e-01 : f32
      %17 = vector.broadcast %cst_14 : f32 to vector<8x128xf32>
      %18 = arith.mulf %17, %16 : vector<8x128xf32>
      %19 = math.tanh %18 : vector<8x128xf32>
      %cst_15 = arith.constant 5.000000e-01 : f32
      %20 = vector.broadcast %cst_15 : f32 to vector<8x128xf32>
      %21 = arith.mulf %20, %19 : vector<8x128xf32>
      %cst_16 = arith.constant 5.000000e-01 : f32
      %22 = vector.broadcast %cst_16 : f32 to vector<8x128xf32>
      %23 = arith.addf %21, %22 : vector<8x128xf32>
      %24 = vector.extract_strided_slice %15 {offsets = [0, 128], sizes = [8, 128], strides = [1, 1]} : vector<8x640xf32> to vector<8x128xf32>
      %cst_17 = arith.constant 5.000000e-01 : f32
      %25 = vector.broadcast %cst_17 : f32 to vector<8x128xf32>
      %26 = arith.mulf %25, %24 : vector<8x128xf32>
      %27 = math.tanh %26 : vector<8x128xf32>
      %cst_18 = arith.constant 5.000000e-01 : f32
      %28 = vector.broadcast %cst_18 : f32 to vector<8x128xf32>
      %29 = arith.mulf %28, %27 : vector<8x128xf32>
      %cst_19 = arith.constant 5.000000e-01 : f32
      %30 = vector.broadcast %cst_19 : f32 to vector<8x128xf32>
      %31 = arith.addf %29, %30 : vector<8x128xf32>
      %32 = vector.extract_strided_slice %15 {offsets = [0, 256], sizes = [8, 128], strides = [1, 1]} : vector<8x640xf32> to vector<8x128xf32>
      %33 = math.tanh %32 : vector<8x128xf32>
      %34 = vector.extract_strided_slice %15 {offsets = [0, 384], sizes = [8, 256], strides = [1, 1]} : vector<8x640xf32> to vector<8x256xf32>
      %cst_20 = arith.constant 5.000000e-01 : f32
      %35 = vector.broadcast %cst_20 : f32 to vector<8x256xf32>
      %36 = arith.mulf %35, %34 : vector<8x256xf32>
      %37 = math.tanh %36 : vector<8x256xf32>
      %cst_21 = arith.constant 5.000000e-01 : f32
      %38 = vector.broadcast %cst_21 : f32 to vector<8x256xf32>
      %39 = arith.mulf %38, %37 : vector<8x256xf32>
      %cst_22 = arith.constant 5.000000e-01 : f32
      %40 = vector.broadcast %cst_22 : f32 to vector<8x256xf32>
      %41 = arith.addf %39, %40 : vector<8x256xf32>
      %c0_23 = arith.constant 0 : index
      %c0_24 = arith.constant 0 : index
      %42 = vector.load %arg3[%c0_23, %c0_24] : memref<8x256xf32, #tpu.memory_space<vmem>>, vector<8x256xf32>
      %43 = arith.mulf %41, %42 : vector<8x256xf32>
      %44 = vector.extract_strided_slice %43 {offsets = [0, 0], sizes = [8, 128], strides = [1, 1]} : vector<8x256xf32> to vector<8x128xf32>
      %45 = vector.extract_strided_slice %43 {offsets = [0, 128], sizes = [8, 128], strides = [1, 1]} : vector<8x256xf32> to vector<8x128xf32>
      %46 = arith.addf %44, %45 : vector<8x128xf32>
      %47 = arith.mulf %23, %33 : vector<8x128xf32>
      %48 = arith.addf %47, %46 : vector<8x128xf32>
      %49 = math.tanh %48 : vector<8x128xf32>
      %50 = arith.mulf %31, %49 : vector<8x128xf32>
      %c0_25 = arith.constant 0 : index
      %c0_26 = arith.constant 0 : index
      %51 = vector.load %arg6[%c0_25, %c0_26] : memref<8x256xf32, #tpu.memory_space<vmem>>, vector<8x128xf32>
      tpu.vector_store %arg6[%c0_25, %c0_26], %50 {strides = array<i32>} : memref<8x256xf32, #tpu.memory_space<vmem>>, vector<8x128xf32>,
      %c0_27 = arith.constant 0 : index
      %c128 = arith.constant 128 : index
      %52 = vector.load %arg6[%c0_27, %c128] : memref<8x256xf32, #tpu.memory_space<vmem>>, vector<8x128xf32>
      tpu.vector_store %arg6[%c0_27, %c128], %48 {strides = array<i32>} : memref<8x256xf32, #tpu.memory_space<vmem>>, vector<8x128xf32>,
    } else {
    }
    return
  }
  func.func @transform_0(%arg0: i32, %arg1: i32) -> (i32, i32) {
    %c0_i32 = arith.constant 0 : i32
    return %arg0, %arg1 : i32, i32
  }
  func.func @transform_1(%arg0: i32, %arg1: i32) -> (i32, i32) {
    %c0_i32 = arith.constant 0 : i32
    %c0_i32_0 = arith.constant 0 : i32
    return %arg0, %c0_i32 : i32, i32
  }
  func.func @transform_2(%arg0: i32, %arg1: i32) -> (i32, i32) {
    %c0_i32 = arith.constant 0 : i32
    %c0_i32_0 = arith.constant 0 : i32
    return %arg1, %c0_i32 : i32, i32
  }
  func.func @transform_3(%arg0: i32, %arg1: i32) -> (i32, i32) {
    %c0_i32 = arith.constant 0 : i32
    %c0_i32_0 = arith.constant 0 : i32
    %c0_i32_1 = arith.constant 0 : i32
    return %c0_i32, %c0_i32_0 : i32, i32
  }
  func.func @transform_4(%arg0: i32, %arg1: i32) -> (i32, i32) {
    %c0_i32 = arith.constant 0 : i32
    %c0_i32_0 = arith.constant 0 : i32
    return %arg0, %c0_i32 : i32, i32
  }
}

module attributes {stable_mosaic.version = 11 : i64} {
  func.func @nary_tree_lstm_kernel(%arg0: i32, %arg1: i32, %arg2: memref<8x384xbf16, #tpu.memory_space<vmem>>, %arg3: memref<8x256xf32, #tpu.memory_space<vmem>>, %arg4: memref<384x640xbf16, #tpu.memory_space<vmem>>, %arg5: memref<1x640xf32, #tpu.memory_space<vmem>>, %arg6: memref<8x256xf32, #tpu.memory_space<vmem>>, %arg7: memref<8x640xf32, #tpu.memory_space<vmem>>) attributes {dimension_semantics = [#tpu.dimension_semantics<parallel>, #tpu.dimension_semantics<arbitrary>], iteration_bounds = array<i64: 1, 1>, scalar_prefetch = 0 : i64, scratch_operands = 1 : i64, tpu.core_type = #tpu.core_type<tc>, window_params = [{transform_indices = @transform_0, window_bounds = array<i64: 8, 384>}, {transform_indices = @transform_1, window_bounds = array<i64: 8, 256>}, {transform_indices = @transform_2, window_bounds = array<i64: 384, 640>}, {pipeline_mode = #tpu.pipeline_mode<synchronous>, transform_indices = @transform_3, window_bounds = array<i64: 1, 640>}, {transform_indices = @transform_4, window_bounds = array<i64: 8, 256>}]} {
    %c0_i32 = arith.constant 0 : i32
    %0 = arith.cmpi eq, %arg1, %c0_i32 : i32
    %1 = arith.extui %0 : i1 to i32
    %c0_i32_0 = arith.constant 0 : i32
    %2 = arith.cmpi ne, %1, %c0_i32_0 : i32
    scf.if %2 {
      %cst_10 = arith.constant 0.000000e+00 : f32
      %12 = vector.broadcast %cst_10 : f32 to vector<8x640xf32>
      %c0_11 = arith.constant 0 : index
      %c0_12 = arith.constant 0 : index
      %13 = vector.load %arg7[%c0_11, %c0_12] : memref<8x640xf32, #tpu.memory_space<vmem>>, vector<8x640xf32>
      tpu.vector_store %arg7[%c0_11, %c0_12], %12 {strides = array<i32>} : memref<8x640xf32, #tpu.memory_space<vmem>>, vector<8x640xf32>,
    } else {
    }
    %c0 = arith.constant 0 : index
    %c0_1 = arith.constant 0 : index
    %3 = vector.load %arg7[%c0, %c0_1] : memref<8x640xf32, #tpu.memory_space<vmem>>, vector<8x640xf32>
    %c0_2 = arith.constant 0 : index
    %c0_3 = arith.constant 0 : index
    %4 = vector.load %arg2[%c0_2, %c0_3] : memref<8x384xbf16, #tpu.memory_space<vmem>>, vector<8x384xbf16>
    %c0_4 = arith.constant 0 : index
    %c0_5 = arith.constant 0 : index
    %5 = vector.load %arg4[%c0_4, %c0_5] : memref<384x640xbf16, #tpu.memory_space<vmem>>, vector<384x640xbf16>
    %cst = arith.constant dense<0.000000e+00> : vector<8x640xf32>
    %6 = tpu.matmul %4, %5, %cst {dimension_numbers = #tpu.dot_dimension_numbers<[1], [0], [0], [1], [0, 0, 1, 1], [], []>} : vector<8x384xbf16>, vector<384x640xbf16>, vector<8x640xf32> -> vector<8x640xf32>
    %7 = arith.addf %3, %6 : vector<8x640xf32>
    %c0_6 = arith.constant 0 : index
    %c0_7 = arith.constant 0 : index
    %8 = vector.load %arg7[%c0_6, %c0_7] : memref<8x640xf32, #tpu.memory_space<vmem>>, vector<8x640xf32>
    tpu.vector_store %arg7[%c0_6, %c0_7], %7 {strides = array<i32>} : memref<8x640xf32, #tpu.memory_space<vmem>>, vector<8x640xf32>,
    %c0_i32_8 = arith.constant 0 : i32
    %9 = arith.cmpi eq, %arg1, %c0_i32_8 : i32
    %10 = arith.extui %9 : i1 to i32
    %c0_i32_9 = arith.constant 0 : i32
    %11 = arith.cmpi ne, %10, %c0_i32_9 : i32
    scf.if %11 {
      %c0_10 = arith.constant 0 : index
      %c0_11 = arith.constant 0 : index
      %12 = vector.load %arg7[%c0_10, %c0_11] : memref<8x640xf32, #tpu.memory_space<vmem>>, vector<8x640xf32>
      %c0_12 = arith.constant 0 : index
      %c0_13 = arith.constant 0 : index
      %13 = vector.load %arg5[%c0_12, %c0_13] : memref<1x640xf32, #tpu.memory_space<vmem>>, vector<1x640xf32>
      %14 = vector.broadcast %13 : vector<1x640xf32> to vector<8x640xf32>
      %15 = arith.addf %12, %14 : vector<8x640xf32>
      %16 = vector.extract_strided_slice %15 {offsets = [0, 0], sizes = [8, 128], strides = [1, 1]} : vector<8x640xf32> to vector<8x128xf32>
      %cst_14 = arith.constant 5.000000e-01 : f32
      %17 = vector.broadcast %cst_14 : f32 to vector<8x128xf32>
      %18 = arith.mulf %17, %16 : vector<8x128xf32>
      %19 = math.tanh %18 : vector<8x128xf32>
      %cst_15 = arith.constant 5.000000e-01 : f32
      %20 = vector.broadcast %cst_15 : f32 to vector<8x128xf32>
      %21 = arith.mulf %20, %19 : vector<8x128xf32>
      %cst_16 = arith.constant 5.000000e-01 : f32
      %22 = vector.broadcast %cst_16 : f32 to vector<8x128xf32>
      %23 = arith.addf %21, %22 : vector<8x128xf32>
      %24 = vector.extract_strided_slice %15 {offsets = [0, 128], sizes = [8, 128], strides = [1, 1]} : vector<8x640xf32> to vector<8x128xf32>
      %cst_17 = arith.constant 5.000000e-01 : f32
      %25 = vector.broadcast %cst_17 : f32 to vector<8x128xf32>
      %26 = arith.mulf %25, %24 : vector<8x128xf32>
      %27 = math.tanh %26 : vector<8x128xf32>
      %cst_18 = arith.constant 5.000000e-01 : f32
      %28 = vector.broadcast %cst_18 : f32 to vector<8x128xf32>
      %29 = arith.mulf %28, %27 : vector<8x128xf32>
      %cst_19 = arith.constant 5.000000e-01 : f32
      %30 = vector.broadcast %cst_19 : f32 to vector<8x128xf32>
      %31 = arith.addf %29, %30 : vector<8x128xf32>
      %32 = vector.extract_strided_slice %15 {offsets = [0, 256], sizes = [8, 128], strides = [1, 1]} : vector<8x640xf32> to vector<8x128xf32>
      %33 = math.tanh %32 : vector<8x128xf32>
      %34 = vector.extract_strided_slice %15 {offsets = [0, 384], sizes = [8, 256], strides = [1, 1]} : vector<8x640xf32> to vector<8x256xf32>
      %cst_20 = arith.constant 5.000000e-01 : f32
      %35 = vector.broadcast %cst_20 : f32 to vector<8x256xf32>
      %36 = arith.mulf %35, %34 : vector<8x256xf32>
      %37 = math.tanh %36 : vector<8x256xf32>
      %cst_21 = arith.constant 5.000000e-01 : f32
      %38 = vector.broadcast %cst_21 : f32 to vector<8x256xf32>
      %39 = arith.mulf %38, %37 : vector<8x256xf32>
      %cst_22 = arith.constant 5.000000e-01 : f32
      %40 = vector.broadcast %cst_22 : f32 to vector<8x256xf32>
      %41 = arith.addf %39, %40 : vector<8x256xf32>
      %c0_23 = arith.constant 0 : index
      %c0_24 = arith.constant 0 : index
      %42 = vector.load %arg3[%c0_23, %c0_24] : memref<8x256xf32, #tpu.memory_space<vmem>>, vector<8x256xf32>
      %43 = arith.mulf %41, %42 : vector<8x256xf32>
      %44 = vector.extract_strided_slice %43 {offsets = [0, 0], sizes = [8, 128], strides = [1, 1]} : vector<8x256xf32> to vector<8x128xf32>
      %45 = vector.extract_strided_slice %43 {offsets = [0, 128], sizes = [8, 128], strides = [1, 1]} : vector<8x256xf32> to vector<8x128xf32>
      %46 = arith.addf %44, %45 : vector<8x128xf32>
      %47 = arith.mulf %23, %33 : vector<8x128xf32>
      %48 = arith.addf %47, %46 : vector<8x128xf32>
      %49 = math.tanh %48 : vector<8x128xf32>
      %50 = arith.mulf %31, %49 : vector<8x128xf32>
      %c0_25 = arith.constant 0 : index
      %c0_26 = arith.constant 0 : index
      %51 = vector.load %arg6[%c0_25, %c0_26] : memref<8x256xf32, #tpu.memory_space<vmem>>, vector<8x128xf32>
      tpu.vector_store %arg6[%c0_25, %c0_26], %50 {strides = array<i32>} : memref<8x256xf32, #tpu.memory_space<vmem>>, vector<8x128xf32>,
      %c0_27 = arith.constant 0 : index
      %c128 = arith.constant 128 : index
      %52 = vector.load %arg6[%c0_27, %c128] : memref<8x256xf32, #tpu.memory_space<vmem>>, vector<8x128xf32>
      tpu.vector_store %arg6[%c0_27, %c128], %48 {strides = array<i32>} : memref<8x256xf32, #tpu.memory_space<vmem>>, vector<8x128xf32>,
    } else {
    }
    return
  }
  func.func @transform_0(%arg0: i32, %arg1: i32) -> (i32, i32) {
    %c0_i32 = arith.constant 0 : i32
    return %arg0, %arg1 : i32, i32
  }
  func.func @transform_1(%arg0: i32, %arg1: i32) -> (i32, i32) {
    %c0_i32 = arith.constant 0 : i32
    %c0_i32_0 = arith.constant 0 : i32
    return %arg0, %c0_i32 : i32, i32
  }
  func.func @transform_2(%arg0: i32, %arg1: i32) -> (i32, i32) {
    %c0_i32 = arith.constant 0 : i32
    %c0_i32_0 = arith.constant 0 : i32
    return %arg1, %c0_i32 : i32, i32
  }
  func.func @transform_3(%arg0: i32, %arg1: i32) -> (i32, i32) {
    %c0_i32 = arith.constant 0 : i32
    %c0_i32_0 = arith.constant 0 : i32
    %c0_i32_1 = arith.constant 0 : i32
    return %c0_i32, %c0_i32_0 : i32, i32
  }
  func.func @transform_4(%arg0: i32, %arg1: i32) -> (i32, i32) {
    %c0_i32 = arith.constant 0 : i32
    %c0_i32_0 = arith.constant 0 : i32
    return %arg0, %c0_i32 : i32, i32
  }
}

</mosaic_0001>

<llo_original>
// kernel: tpu_custom_call.1
$region0: #{tpu_custom_call.1}
  #allocation0 [shape = 'u32[]', space=smem, size = 0x4, offset = 0x4, fixed_abs, tag = 'smem constant byte address 0x4 - core index']
  #allocation1 [shape = 'u32[144,128]{1,0:T(1,128)}', space=vmem, size = 0x12000, scoped, tag = 'internal scratch']
  #allocation2 [shape = 'f32[8,640]{1,0:T(8,128)}', space=vmem, size = 0x5000, scoped, tag = 'scratch operand']
  %s0 = inlined_call_operand.hbm [shape: bf16[8,384], index: 0, kind: input, shape index: {}]
  %s1 = inlined_call_operand.hbm [shape: f32[8,256], index: 1, kind: input, shape index: {}]
  %s2 = inlined_call_operand.hbm [shape: bf16[384,640], index: 2, kind: input, shape index: {}]
  %s3 = inlined_call_operand.vmem [shape: f32[1,640], index: 3, kind: input, shape index: {}]
  %s4 = inlined_call_operand.hbm [shape: f32[8,256], index: 4, kind: output, shape index: {}]
  %s5 = sld [smem:[#allocation0]]
  $region46: #{tpu_custom_call.1} parent=0
    _
  %s7 = ssub.s32 1, %s5
  %s8 = scalar_select 0, %s7, %s5
  $region1: #{tpu_custom_call.1} parent=0
    #allocation3 [shape = 'u8[6144]{0}', space=vmem, size = 0x1800, scoped, tag = 'input window, operand 0, single buffered']
    #allocation4 [shape = 's32[1]{0}', space=sflag, size = 0x4, scoped, tag = 'scoped memory for tpu_custom_call.1']
    #allocation5 [shape = 's32[1]{0}', space=sflag, size = 0x4, scoped, tag = 'scoped memory for tpu_custom_call.1']
    #allocation6 [shape = 'u8[8192]{0}', space=vmem, size = 0x2000, scoped, tag = 'input window, operand 1, single buffered']
    #allocation7 [shape = 's32[1]{0}', space=sflag, size = 0x4, scoped, tag = 'scoped memory for tpu_custom_call.1']
    #allocation8 [shape = 'u8[491520]{0}', space=vmem, size = 0x78000, scoped, tag = 'input window, operand 2, single buffered']
    #allocation9 [shape = 'u8[8192]{0}', space=vmem, size = 0x2000, scoped, tag = 'output window, operand 0, single buffered']
    %9 = vsyncpa [#allocation4], 0
    %10 = vsyncpa [#allocation7], 0
    %11 = vsyncpa [#allocation5], 0
    // Predicated region
    $region2: #{tpu_custom_call.1} parent=1 // pred_check
      _
    $region3: #{tpu_custom_call.1} parent=1 // pred_check_branch
      %13 = sbr.rel (0) target = $region5
    $region4: #{tpu_custom_call.1} parent=1 // pred_region
      %s15 = ssub.s32 192, 192
      %16 = vsyncadd [#allocation4], %s15
      %s18 = sshll.u32 [#allocation3], 4
      %s19 = int_to_ptr.vmem [resolvable:$true] %s18
      %21 = dma.hbm_to_vmem [thread:$0]  %s0, 192, %s19, [#allocation4]
    $region5: #{tpu_custom_call.1} parent=1 // pred_fallthru
      _
    // Predicated region
    $region6: #{tpu_custom_call.1} parent=1 // pred_check
      _
    $region7: #{tpu_custom_call.1} parent=1 // pred_check_branch
      %23 = sbr.rel (0) target = $region9
    $region8: #{tpu_custom_call.1} parent=1 // pred_region
      %s25 = ssub.s32 256, 256
      %26 = vsyncadd [#allocation7], %s25
      %s28 = sshll.u32 [#allocation6], 4
      %s29 = int_to_ptr.vmem [resolvable:$true] %s28
      %31 = dma.hbm_to_vmem [thread:$0]  %s1, 256, %s29, [#allocation7]
    $region9: #{tpu_custom_call.1} parent=1 // pred_fallthru
      _
    // Predicated region
    $region10: #{tpu_custom_call.1} parent=1 // pred_check
      _
    $region11: #{tpu_custom_call.1} parent=1 // pred_check_branch
      %33 = sbr.rel (0) target = $region13
    $region12: #{tpu_custom_call.1} parent=1 // pred_region
      %s35 = ssub.s32 15360, 15360
      %36 = vsyncadd [#allocation7], %s35
      %s37 = sshll.u32 [#allocation8], 4
      %s38 = int_to_ptr.vmem [resolvable:$true] %s37
      %43 = dma.hbm_to_vmem [thread:$0]  %s2, 15360, %s38, [#allocation7], 320, 320, 20
    $region13: #{tpu_custom_call.1} parent=1 // pred_fallthru
      _
    // Predicated region
    $region14: #{tpu_custom_call.1} parent=1 // pred_check
      _
    $region15: #{tpu_custom_call.1} parent=1 // pred_check_branch
      %45 = sbr.rel (0) target = $region17
    $region16: #{tpu_custom_call.1} parent=1 // pred_region
      _
    $region17: #{tpu_custom_call.1} parent=1 // pred_fallthru
      _
    // Predicated region
    $region18: #{tpu_custom_call.1} parent=1 // pred_check
      _
    $region19: #{tpu_custom_call.1} parent=1 // pred_check_branch
      %47 = sbr.rel (0) target = $region21
    $region20: #{tpu_custom_call.1} parent=1 // pred_region
      %48 = dma.done [#allocation4], 192
    $region21: #{tpu_custom_call.1} parent=1 // pred_fallthru
      _
    // Predicated region
    $region22: #{tpu_custom_call.1} parent=1 // pred_check
      _
    $region23: #{tpu_custom_call.1} parent=1 // pred_check_branch
      %50 = sbr.rel (0) target = $region25
    $region24: #{tpu_custom_call.1} parent=1 // pred_region
      %51 = dma.done [#allocation7], 256
    $region25: #{tpu_custom_call.1} parent=1 // pred_fallthru
      _
    // Predicated region
    $region26: #{tpu_custom_call.1} parent=1 // pred_check
      _
    $region27: #{tpu_custom_call.1} parent=1 // pred_check_branch
      %53 = sbr.rel (0) target = $region29
    $region28: #{tpu_custom_call.1} parent=1 // pred_region
      %54 = dma.done [#allocation7], 15360
    $region29: #{tpu_custom_call.1} parent=1 // pred_fallthru
      _
    %p56 = scmp.eq.s32.totalorder 0, 0
    // Predicated region
    $region30: #{tpu_custom_call.1} parent=1 // pred_check
      %p57 = pneg %p56
    $region31: #{tpu_custom_call.1} parent=1 // pred_check_branch
      %59 = sbr.rel (%p57) target = $region33
    $region32: #{tpu_custom_call.1} parent=1 // pred_region
      %60 = vst [vmem:[#allocation2] sm:$0xff] 0.0
      %61 = vst [vmem:[#allocation2 + $0x8] sm:$0xff] 0.0
      %62 = vst [vmem:[#allocation2 + $0x10] sm:$0xff] 0.0
      %63 = vst [vmem:[#allocation2 + $0x18] sm:$0xff] 0.0
      %64 = vst [vmem:[#allocation2 + $0x20] sm:$0xff] 0.0
    $region33: #{tpu_custom_call.1} parent=1 // pred_fallthru
      _
    %v65 = vld [vmem:[#allocation2] sm:$0xff]
    %v66 = vld [vmem:[#allocation2 + $0x8] sm:$0xff]
    %v67 = vld [vmem:[#allocation2 + $0x10] sm:$0xff]
    %v68 = vld [vmem:[#allocation2 + $0x18] sm:$0xff]
    %v69 = vld [vmem:[#allocation2 + $0x20] sm:$0xff]
    %v70 = vld [vmem:[#allocation3] sm:$0xff]
    %v71 = vld [vmem:[#allocation3 + $0x8] sm:$0xf]
    %v72 = vld [vmem:[#allocation8] sm:$0xff]
    %v73 = vld [vmem:[#allocation8 + $0x8] sm:$0xff]
    %v74 = vld [vmem:[#allocation8 + $0x10] sm:$0xf]
    %v75 = vld [vmem:[#allocation8 + $0x14] sm:$0xff]
    %v76 = vld [vmem:[#allocation8 + $0x1c] sm:$0xff]
    %v77 = vld [vmem:[#allocation8 + $0x24] sm:$0xf]
    %v78 = vld [vmem:[#allocation8 + $0x28] sm:$0xff]
    %v79 = vld [vmem:[#allocation8 + $0x30] sm:$0xff]
    %v80 = vld [vmem:[#allocation8 + $0x38] sm:$0xf]
    %v81 = vld [vmem:[#allocation8 + $0x3c] sm:$0xff]
    %v82 = vld [vmem:[#allocation8 + $0x44] sm:$0xff]
    %v83 = vld [vmem:[#allocation8 + $0x4c] sm:$0xf]
    %v84 = vld [vmem:[#allocation8 + $0x50] sm:$0xff]
    %v85 = vld [vmem:[#allocation8 + $0x58] sm:$0xff]
    %v86 = vld [vmem:[#allocation8 + $0x60] sm:$0xf]
    %v87 = vld [vmem:[#allocation8 + $0x64] sm:$0xff]
    %v88 = vld [vmem:[#allocation8 + $0x6c] sm:$0xff]
    %v89 = vld [vmem:[#allocation8 + $0x74] sm:$0xf]
    %v90 = vld [vmem:[#allocation8 + $0x78] sm:$0xff]
    %v91 = vld [vmem:[#allocation8 + $0x80] sm:$0xff]
    %v92 = vld [vmem:[#allocation8 + $0x88] sm:$0xf]
    %v93 = vld [vmem:[#allocation8 + $0x8c] sm:$0xff]
    %v94 = vld [vmem:[#allocation8 + $0x94] sm:$0xff]
    %v95 = vld [vmem:[#allocation8 + $0x9c] sm:$0xf]
    %v96 = vld [vmem:[#allocation8 + $0xa0] sm:$0xff]
    %v97 = vld [vmem:[#allocation8 + $0xa8] sm:$0xff]
    %v98 = vld [vmem:[#allocation8 + $0xb0] sm:$0xf]
    %v99 = vld [vmem:[#allocation8 + $0xb4] sm:$0xff]
    %v100 = vld [vmem:[#allocation8 + $0xbc] sm:$0xff]
    %v101 = vld [vmem:[#allocation8 + $0xc4] sm:$0xf]
    %v102 = vld [vmem:[#allocation8 + $0xc8] sm:$0xff]
    %v103 = vld [vmem:[#allocation8 + $0xd0] sm:$0xff]
    %v104 = vld [vmem:[#allocation8 + $0xd8] sm:$0xf]
    %v105 = vld [vmem:[#allocation8 + $0xdc] sm:$0xff]
    %v106 = vld [vmem:[#allocation8 + $0xe4] sm:$0xff]
    %v107 = vld [vmem:[#allocation8 + $0xec] sm:$0xf]
    %v108 = vld [vmem:[#allocation8 + $0xf0] sm:$0xff]
    %v109 = vld [vmem:[#allocation8 + $0xf8] sm:$0xff]
    %v110 = vld [vmem:[#allocation8 + $0x100] sm:$0xf]
    %v111 = vld [vmem:[#allocation8 + $0x104] sm:$0xff]
    %v112 = vld [vmem:[#allocation8 + $0x10c] sm:$0xff]
    %v113 = vld [vmem:[#allocation8 + $0x114] sm:$0xf]
    %v114 = vld [vmem:[#allocation8 + $0x118] sm:$0xff]
    %v115 = vld [vmem:[#allocation8 + $0x120] sm:$0xff]
    %v116 = vld [vmem:[#allocation8 + $0x128] sm:$0xf]
    %v117 = vld [vmem:[#allocation8 + $0x12c] sm:$0xff]
    %v118 = vld [vmem:[#allocation8 + $0x134] sm:$0xff]
    %v119 = vld [vmem:[#allocation8 + $0x13c] sm:$0xf]
    %v120 = vld [vmem:[#allocation8 + $0x140] sm:$0xff]
    %v121 = vld [vmem:[#allocation8 + $0x148] sm:$0xff]
    %v122 = vld [vmem:[#allocation8 + $0x150] sm:$0xf]
    %v123 = vld [vmem:[#allocation8 + $0x154] sm:$0xff]
    %v124 = vld [vmem:[#allocation8 + $0x15c] sm:$0xff]
    %v125 = vld [vmem:[#allocation8 + $0x164] sm:$0xf]
    %v126 = vld [vmem:[#allocation8 + $0x168] sm:$0xff]
    %v127 = vld [vmem:[#allocation8 + $0x170] sm:$0xff]
    %v128 = vld [vmem:[#allocation8 + $0x178] sm:$0xf]
    %v129 = vld [vmem:[#allocation8 + $0x17c] sm:$0xff]
    %v130 = vld [vmem:[#allocation8 + $0x184] sm:$0xff]
    %v131 = vld [vmem:[#allocation8 + $0x18c] sm:$0xf]
    %v132 = vld [vmem:[#allocation8 + $0x190] sm:$0xff]
    %v133 = vld [vmem:[#allocation8 + $0x198] sm:$0xff]
    %v134 = vld [vmem:[#allocation8 + $0x1a0] sm:$0xf]
    %v135 = vld [vmem:[#allocation8 + $0x1a4] sm:$0xff]
    %v136 = vld [vmem:[#allocation8 + $0x1ac] sm:$0xff]
    %v137 = vld [vmem:[#allocation8 + $0x1b4] sm:$0xf]
    %v138 = vld [vmem:[#allocation8 + $0x1b8] sm:$0xff]
    %v139 = vld [vmem:[#allocation8 + $0x1c0] sm:$0xff]
    %v140 = vld [vmem:[#allocation8 + $0x1c8] sm:$0xf]
    %v141 = vld [vmem:[#allocation8 + $0x1cc] sm:$0xff]
    %v142 = vld [vmem:[#allocation8 + $0x1d4] sm:$0xff]
    %v143 = vld [vmem:[#allocation8 + $0x1dc] sm:$0xf]
    %v144 = vld [vmem:[#allocation8 + $0x1e0] sm:$0xff]
    %v145 = vld [vmem:[#allocation8 + $0x1e8] sm:$0xff]
    %v146 = vld [vmem:[#allocation8 + $0x1f0] sm:$0xf]
    %v147 = vld [vmem:[#allocation8 + $0x1f4] sm:$0xff]
    %v148 = vld [vmem:[#allocation8 + $0x1fc] sm:$0xff]
    %v149 = vld [vmem:[#allocation8 + $0x204] sm:$0xf]
    %v150 = vld [vmem:[#allocation8 + $0x208] sm:$0xff]
    %v151 = vld [vmem:[#allocation8 + $0x210] sm:$0xff]
    %v152 = vld [vmem:[#allocation8 + $0x218] sm:$0xf]
    %v153 = vld [vmem:[#allocation8 + $0x21c] sm:$0xff]
    %v154 = vld [vmem:[#allocation8 + $0x224] sm:$0xff]
    %v155 = vld [vmem:[#allocation8 + $0x22c] sm:$0xf]
    %v156 = vld [vmem:[#allocation8 + $0x230] sm:$0xff]
    %v157 = vld [vmem:[#allocation8 + $0x238] sm:$0xff]
    %v158 = vld [vmem:[#allocation8 + $0x240] sm:$0xf]
    %v159 = vld [vmem:[#allocation8 + $0x244] sm:$0xff]
    %v160 = vld [vmem:[#allocation8 + $0x24c] sm:$0xff]
    %v161 = vld [vmem:[#allocation8 + $0x254] sm:$0xf]
    %v162 = vld [vmem:[#allocation8 + $0x258] sm:$0xff]
    %v163 = vld [vmem:[#allocation8 + $0x260] sm:$0xff]
    %v164 = vld [vmem:[#allocation8 + $0x268] sm:$0xf]
    %v165 = vld [vmem:[#allocation8 + $0x26c] sm:$0xff]
    %v166 = vld [vmem:[#allocation8 + $0x274] sm:$0xff]
    %v167 = vld [vmem:[#allocation8 + $0x27c] sm:$0xf]
    %v168 = vld [vmem:[#allocation8 + $0x280] sm:$0xff]
    %v169 = vld [vmem:[#allocation8 + $0x288] sm:$0xff]
    %v170 = vld [vmem:[#allocation8 + $0x290] sm:$0xf]
    %v171 = vld [vmem:[#allocation8 + $0x294] sm:$0xff]
    %v172 = vld [vmem:[#allocation8 + $0x29c] sm:$0xff]
    %v173 = vld [vmem:[#allocation8 + $0x2a4] sm:$0xf]
    %v174 = vld [vmem:[#allocation8 + $0x2a8] sm:$0xff]
    %v175 = vld [vmem:[#allocation8 + $0x2b0] sm:$0xff]
    %v176 = vld [vmem:[#allocation8 + $0x2b8] sm:$0xf]
    %v177 = vld [vmem:[#allocation8 + $0x2bc] sm:$0xff]
    %v178 = vld [vmem:[#allocation8 + $0x2c4] sm:$0xff]
    %v179 = vld [vmem:[#allocation8 + $0x2cc] sm:$0xf]
    %v180 = vld [vmem:[#allocation8 + $0x2d0] sm:$0xff]
    %v181 = vld [vmem:[#allocation8 + $0x2d8] sm:$0xff]
    %v182 = vld [vmem:[#allocation8 + $0x2e0] sm:$0xf]
    %v183 = vld [vmem:[#allocation8 + $0x2e4] sm:$0xff]
    %v184 = vld [vmem:[#allocation8 + $0x2ec] sm:$0xff]
    %v185 = vld [vmem:[#allocation8 + $0x2f4] sm:$0xf]
    %v186 = vld [vmem:[#allocation8 + $0x2f8] sm:$0xff]
    %v187 = vld [vmem:[#allocation8 + $0x300] sm:$0xff]
    %v188 = vld [vmem:[#allocation8 + $0x308] sm:$0xf]
    %v189 = vld [vmem:[#allocation8 + $0x30c] sm:$0xff]
    %v190 = vld [vmem:[#allocation8 + $0x314] sm:$0xff]
    %v191 = vld [vmem:[#allocation8 + $0x31c] sm:$0xf]
    %v192 = vld [vmem:[#allocation8 + $0x320] sm:$0xff]
    %v193 = vld [vmem:[#allocation8 + $0x328] sm:$0xff]
    %v194 = vld [vmem:[#allocation8 + $0x330] sm:$0xf]
    %v195 = vld [vmem:[#allocation8 + $0x334] sm:$0xff]
    %v196 = vld [vmem:[#allocation8 + $0x33c] sm:$0xff]
    %v197 = vld [vmem:[#allocation8 + $0x344] sm:$0xf]
    %v198 = vld [vmem:[#allocation8 + $0x348] sm:$0xff]
    %v199 = vld [vmem:[#allocation8 + $0x350] sm:$0xff]
    %v200 = vld [vmem:[#allocation8 + $0x358] sm:$0xf]
    %v201 = vld [vmem:[#allocation8 + $0x35c] sm:$0xff]
    %v202 = vld [vmem:[#allocation8 + $0x364] sm:$0xff]
    %v203 = vld [vmem:[#allocation8 + $0x36c] sm:$0xf]
    %v204 = vld [vmem:[#allocation8 + $0x370] sm:$0xff]
    %v205 = vld [vmem:[#allocation8 + $0x378] sm:$0xff]
    %v206 = vld [vmem:[#allocation8 + $0x380] sm:$0xf]
    %v207 = vld [vmem:[#allocation8 + $0x384] sm:$0xff]
    %v208 = vld [vmem:[#allocation8 + $0x38c] sm:$0xff]
    %v209 = vld [vmem:[#allocation8 + $0x394] sm:$0xf]
    %v210 = vld [vmem:[#allocation8 + $0x398] sm:$0xff]
    %v211 = vld [vmem:[#allocation8 + $0x3a0] sm:$0xff]
    %v212 = vld [vmem:[#allocation8 + $0x3a8] sm:$0xf]
    %v213 = vld [vmem:[#allocation8 + $0x3ac] sm:$0xff]
    %v214 = vld [vmem:[#allocation8 + $0x3b4] sm:$0xff]
    %v215 = vld [vmem:[#allocation8 + $0x3bc] sm:$0xf]
    %v218 = vunpack.c.l.b16 %v70
    %v219 = vunpack.c.h.b16 %v70
    %v220 = vunpack.c.l.b16 %v71
    %v221 = vpack.c.b16 %v218, %v218
    %v222 = vpack.c.b16 %v219, %v219
    %v223 = vpack.c.b16 %v220, %v220
    %v371 = vunpack.c.l.b16 %v72
    %v372 = vunpack.c.h.b16 %v72
    %v373 = vunpack.c.l.b16 %v73
    %v374 = vunpack.c.h.b16 %v73
    %v375 = vunpack.c.l.b16 %v74
    %v376 = vunpack.c.l.b16 %v75
    %v377 = vunpack.c.h.b16 %v75
    %v378 = vunpack.c.l.b16 %v76
    %v379 = vunpack.c.h.b16 %v76
    %v380 = vunpack.c.l.b16 %v77
    %v381 = vunpack.c.l.b16 %v78
    %v382 = vunpack.c.h.b16 %v78
    %v383 = vunpack.c.l.b16 %v79
    %v384 = vunpack.c.h.b16 %v79
    %v385 = vunpack.c.l.b16 %v80
    %v386 = vunpack.c.l.b16 %v81
    %v387 = vunpack.c.h.b16 %v81
    %v388 = vunpack.c.l.b16 %v82
    %v389 = vunpack.c.h.b16 %v82
    %v390 = vunpack.c.l.b16 %v83
    %v391 = vunpack.c.l.b16 %v84
    %v392 = vunpack.c.h.b16 %v84
    %v393 = vunpack.c.l.b16 %v85
    %v394 = vunpack.c.h.b16 %v85
    %v395 = vunpack.c.l.b16 %v86
    %v396 = vunpack.c.l.b16 %v87
    %v397 = vunpack.c.h.b16 %v87
    %v398 = vunpack.c.l.b16 %v88
    %v399 = vunpack.c.h.b16 %v88
    %v400 = vunpack.c.l.b16 %v89
    %v401 = vunpack.c.l.b16 %v90
    %v402 = vunpack.c.h.b16 %v90
    %v403 = vunpack.c.l.b16 %v91
    %v404 = vunpack.c.h.b16 %v91
    %v405 = vunpack.c.l.b16 %v92
    %v406 = vunpack.c.l.b16 %v93
    %v407 = vunpack.c.h.b16 %v93
    %v408 = vunpack.c.l.b16 %v94
    %v409 = vunpack.c.h.b16 %v94
    %v410 = vunpack.c.l.b16 %v95
    %v411 = vunpack.c.l.b16 %v96
    %v412 = vunpack.c.h.b16 %v96
    %v413 = vunpack.c.l.b16 %v97
    %v414 = vunpack.c.h.b16 %v97
    %v415 = vunpack.c.l.b16 %v98
    %v416 = vunpack.c.l.b16 %v99
    %v417 = vunpack.c.h.b16 %v99
    %v418 = vunpack.c.l.b16 %v100
    %v419 = vunpack.c.h.b16 %v100
    %v420 = vunpack.c.l.b16 %v101
    %v421 = vunpack.c.l.b16 %v102
    %v422 = vunpack.c.h.b16 %v102
    %v423 = vunpack.c.l.b16 %v103
    %v424 = vunpack.c.h.b16 %v103
    %v425 = vunpack.c.l.b16 %v104
    %v426 = vunpack.c.l.b16 %v105
    %v427 = vunpack.c.h.b16 %v105
    %v428 = vunpack.c.l.b16 %v106
    %v429 = vunpack.c.h.b16 %v106
    %v430 = vunpack.c.l.b16 %v107
    %v431 = vunpack.c.l.b16 %v108
    %v432 = vunpack.c.h.b16 %v108
    %v433 = vunpack.c.l.b16 %v109
    %v434 = vunpack.c.h.b16 %v109
    %v435 = vunpack.c.l.b16 %v110
    %v436 = vunpack.c.l.b16 %v111
    %v437 = vunpack.c.h.b16 %v111
    %v438 = vunpack.c.l.b16 %v112
    %v439 = vunpack.c.h.b16 %v112
    %v440 = vunpack.c.l.b16 %v113
    %v441 = vunpack.c.l.b16 %v114
    %v442 = vunpack.c.h.b16 %v114
    %v443 = vunpack.c.l.b16 %v115
    %v444 = vunpack.c.h.b16 %v115
    %v445 = vunpack.c.l.b16 %v116
    %v446 = vunpack.c.l.b16 %v117
    %v447 = vunpack.c.h.b16 %v117
    %v448 = vunpack.c.l.b16 %v118
    %v449 = vunpack.c.h.b16 %v118
    %v450 = vunpack.c.l.b16 %v119
    %v451 = vunpack.c.l.b16 %v120
    %v452 = vunpack.c.h.b16 %v120
    %v453 = vunpack.c.l.b16 %v121
    %v454 = vunpack.c.h.b16 %v121
    %v455 = vunpack.c.l.b16 %v122
    %v456 = vunpack.c.l.b16 %v123
    %v457 = vunpack.c.h.b16 %v123
    %v458 = vunpack.c.l.b16 %v124
    %v459 = vunpack.c.h.b16 %v124
    %v460 = vunpack.c.l.b16 %v125
    %v461 = vunpack.c.l.b16 %v126
    %v462 = vunpack.c.h.b16 %v126
    %v463 = vunpack.c.l.b16 %v127
    %v464 = vunpack.c.h.b16 %v127
    %v465 = vunpack.c.l.b16 %v128
    %v466 = vunpack.c.l.b16 %v129
    %v467 = vunpack.c.h.b16 %v129
    %v468 = vunpack.c.l.b16 %v130
    %v469 = vunpack.c.h.b16 %v130
    %v470 = vunpack.c.l.b16 %v131
    %v471 = vunpack.c.l.b16 %v132
    %v472 = vunpack.c.h.b16 %v132
    %v473 = vunpack.c.l.b16 %v133
    %v474 = vunpack.c.h.b16 %v133
    %v475 = vunpack.c.l.b16 %v134
    %v476 = vunpack.c.l.b16 %v135
    %v477 = vunpack.c.h.b16 %v135
    %v478 = vunpack.c.l.b16 %v136
    %v479 = vunpack.c.h.b16 %v136
    %v480 = vunpack.c.l.b16 %v137
    %v481 = vunpack.c.l.b16 %v138
    %v482 = vunpack.c.h.b16 %v138
    %v483 = vunpack.c.l.b16 %v139
    %v484 = vunpack.c.h.b16 %v139
    %v485 = vunpack.c.l.b16 %v140
    %v486 = vunpack.c.l.b16 %v141
    %v487 = vunpack.c.h.b16 %v141
    %v488 = vunpack.c.l.b16 %v142
    %v489 = vunpack.c.h.b16 %v142
    %v490 = vunpack.c.l.b16 %v143
    %v491 = vunpack.c.l.b16 %v144
    %v492 = vunpack.c.h.b16 %v144
    %v493 = vunpack.c.l.b16 %v145
    %v494 = vunpack.c.h.b16 %v145
    %v495 = vunpack.c.l.b16 %v146
    %v496 = vunpack.c.l.b16 %v147
    %v497 = vunpack.c.h.b16 %v147
    %v498 = vunpack.c.l.b16 %v148
    %v499 = vunpack.c.h.b16 %v148
    %v500 = vunpack.c.l.b16 %v149
    %v501 = vunpack.c.l.b16 %v150
    %v502 = vunpack.c.h.b16 %v150
    %v503 = vunpack.c.l.b16 %v151
    %v504 = vunpack.c.h.b16 %v151
    %v505 = vunpack.c.l.b16 %v152
    %v506 = vunpack.c.l.b16 %v153
    %v507 = vunpack.c.h.b16 %v153
    %v508 = vunpack.c.l.b16 %v154
    %v509 = vunpack.c.h.b16 %v154
    %v510 = vunpack.c.l.b16 %v155
    %v511 = vunpack.c.l.b16 %v156
    %v512 = vunpack.c.h.b16 %v156
    %v513 = vunpack.c.l.b16 %v157
    %v514 = vunpack.c.h.b16 %v157
    %v515 = vunpack.c.l.b16 %v158
    %v516 = vunpack.c.l.b16 %v159
    %v517 = vunpack.c.h.b16 %v159
    %v518 = vunpack.c.l.b16 %v160
    %v519 = vunpack.c.h.b16 %v160
    %v520 = vunpack.c.l.b16 %v161
    %v521 = vunpack.c.l.b16 %v162
    %v522 = vunpack.c.h.b16 %v162
    %v523 = vunpack.c.l.b16 %v163
    %v524 = vunpack.c.h.b16 %v163
    %v525 = vunpack.c.l.b16 %v164
    %v526 = vunpack.c.l.b16 %v165
    %v527 = vunpack.c.h.b16 %v165
    %v528 = vunpack.c.l.b16 %v166
    %v529 = vunpack.c.h.b16 %v166
    %v530 = vunpack.c.l.b16 %v167
    %v531 = vunpack.c.l.b16 %v168
    %v532 = vunpack.c.h.b16 %v168
    %v533 = vunpack.c.l.b16 %v169
    %v534 = vunpack.c.h.b16 %v169
    %v535 = vunpack.c.l.b16 %v170
    %v536 = vunpack.c.l.b16 %v171
    %v537 = vunpack.c.h.b16 %v171
    %v538 = vunpack.c.l.b16 %v172
    %v539 = vunpack.c.h.b16 %v172
    %v540 = vunpack.c.l.b16 %v173
    %v541 = vunpack.c.l.b16 %v174
    %v542 = vunpack.c.h.b16 %v174
    %v543 = vunpack.c.l.b16 %v175
    %v544 = vunpack.c.h.b16 %v175
    %v545 = vunpack.c.l.b16 %v176
    %v546 = vunpack.c.l.b16 %v177
    %v547 = vunpack.c.h.b16 %v177
    %v548 = vunpack.c.l.b16 %v178
    %v549 = vunpack.c.h.b16 %v178
    %v550 = vunpack.c.l.b16 %v179
    %v551 = vunpack.c.l.b16 %v180
    %v552 = vunpack.c.h.b16 %v180
    %v553 = vunpack.c.l.b16 %v181
    %v554 = vunpack.c.h.b16 %v181
    %v555 = vunpack.c.l.b16 %v182
    %v556 = vunpack.c.l.b16 %v183
    %v557 = vunpack.c.h.b16 %v183
    %v558 = vunpack.c.l.b16 %v184
    %v559 = vunpack.c.h.b16 %v184
    %v560 = vunpack.c.l.b16 %v185
    %v561 = vunpack.c.l.b16 %v186
    %v562 = vunpack.c.h.b16 %v186
    %v563 = vunpack.c.l.b16 %v187
    %v564 = vunpack.c.h.b16 %v187
    %v565 = vunpack.c.l.b16 %v188
    %v566 = vunpack.c.l.b16 %v189
    %v567 = vunpack.c.h.b16 %v189
    %v568 = vunpack.c.l.b16 %v190
    %v569 = vunpack.c.h.b16 %v190
    %v570 = vunpack.c.l.b16 %v191
    %v571 = vunpack.c.l.b16 %v192
    %v572 = vunpack.c.h.b16 %v192
    %v573 = vunpack.c.l.b16 %v193
    %v574 = vunpack.c.h.b16 %v193
    %v575 = vunpack.c.l.b16 %v194
    %v576 = vunpack.c.l.b16 %v195
    %v577 = vunpack.c.h.b16 %v195
    %v578 = vunpack.c.l.b16 %v196
    %v579 = vunpack.c.h.b16 %v196
    %v580 = vunpack.c.l.b16 %v197
    %v581 = vunpack.c.l.b16 %v198
    %v582 = vunpack.c.h.b16 %v198
    %v583 = vunpack.c.l.b16 %v199
    %v584 = vunpack.c.h.b16 %v199
    %v585 = vunpack.c.l.b16 %v200
    %v586 = vunpack.c.l.b16 %v201
    %v587 = vunpack.c.h.b16 %v201
    %v588 = vunpack.c.l.b16 %v202
    %v589 = vunpack.c.h.b16 %v202
    %v590 = vunpack.c.l.b16 %v203
    %v591 = vunpack.c.l.b16 %v204
    %v592 = vunpack.c.h.b16 %v204
    %v593 = vunpack.c.l.b16 %v205
    %v594 = vunpack.c.h.b16 %v205
    %v595 = vunpack.c.l.b16 %v206
    %v596 = vunpack.c.l.b16 %v207
    %v597 = vunpack.c.h.b16 %v207
    %v598 = vunpack.c.l.b16 %v208
    %v599 = vunpack.c.h.b16 %v208
    %v600 = vunpack.c.l.b16 %v209
    %v601 = vunpack.c.l.b16 %v210
    %v602 = vunpack.c.h.b16 %v210
    %v603 = vunpack.c.l.b16 %v211
    %v604 = vunpack.c.h.b16 %v211
    %v605 = vunpack.c.l.b16 %v212
    %v606 = vunpack.c.l.b16 %v213
    %v607 = vunpack.c.h.b16 %v213
    %v608 = vunpack.c.l.b16 %v214
    %v609 = vunpack.c.h.b16 %v214
    %v610 = vunpack.c.l.b16 %v215
    %v611 = vpack.c.b16 %v376, %v371
    %v612 = vpack.c.b16 %v377, %v372
    %v613 = vpack.c.b16 %v378, %v373
    %v614 = vpack.c.b16 %v379, %v374
    %v615 = vpack.c.b16 %v380, %v375
    %v616 = vpack.c.b16 %v386, %v381
    %v617 = vpack.c.b16 %v387, %v382
    %v618 = vpack.c.b16 %v388, %v383
    %v619 = vpack.c.b16 %v389, %v384
    %v620 = vpack.c.b16 %v390, %v385
    %v621 = vpack.c.b16 %v396, %v391
    %v622 = vpack.c.b16 %v397, %v392
    %v623 = vpack.c.b16 %v398, %v393
    %v624 = vpack.c.b16 %v399, %v394
    %v625 = vpack.c.b16 %v400, %v395
    %v626 = vpack.c.b16 %v406, %v401
    %v627 = vpack.c.b16 %v407, %v402
    %v628 = vpack.c.b16 %v408, %v403
    %v629 = vpack.c.b16 %v409, %v404
    %v630 = vpack.c.b16 %v410, %v405
    %v631 = vpack.c.b16 %v416, %v411
    %v632 = vpack.c.b16 %v417, %v412
    %v633 = vpack.c.b16 %v418, %v413
    %v634 = vpack.c.b16 %v419, %v414
    %v635 = vpack.c.b16 %v420, %v415
    %v636 = vpack.c.b16 %v426, %v421
    %v637 = vpack.c.b16 %v427, %v422
    %v638 = vpack.c.b16 %v428, %v423
    %v639 = vpack.c.b16 %v429, %v424
    %v640 = vpack.c.b16 %v430, %v425
    %v641 = vpack.c.b16 %v436, %v431
    %v642 = vpack.c.b16 %v437, %v432
    %v643 = vpack.c.b16 %v438, %v433
    %v644 = vpack.c.b16 %v439, %v434
    %v645 = vpack.c.b16 %v440, %v435
    %v646 = vpack.c.b16 %v446, %v441
    %v647 = vpack.c.b16 %v447, %v442
    %v648 = vpack.c.b16 %v448, %v443
    %v649 = vpack.c.b16 %v449, %v444
    %v650 = vpack.c.b16 %v450, %v445
    %v651 = vpack.c.b16 %v456, %v451
    %v652 = vpack.c.b16 %v457, %v452
    %v653 = vpack.c.b16 %v458, %v453
    %v654 = vpack.c.b16 %v459, %v454
    %v655 = vpack.c.b16 %v460, %v455
    %v656 = vpack.c.b16 %v466, %v461
    %v657 = vpack.c.b16 %v467, %v462
    %v658 = vpack.c.b16 %v468, %v463
    %v659 = vpack.c.b16 %v469, %v464
    %v660 = vpack.c.b16 %v470, %v465
    %v661 = vpack.c.b16 %v476, %v471
    %v662 = vpack.c.b16 %v477, %v472
    %v663 = vpack.c.b16 %v478, %v473
    %v664 = vpack.c.b16 %v479, %v474
    %v665 = vpack.c.b16 %v480, %v475
    %v666 = vpack.c.b16 %v486, %v481
    %v667 = vpack.c.b16 %v487, %v482
    %v668 = vpack.c.b16 %v488, %v483
    %v669 = vpack.c.b16 %v489, %v484
    %v670 = vpack.c.b16 %v490, %v485
    %v671 = vpack.c.b16 %v496, %v491
    %v672 = vpack.c.b16 %v497, %v492
    %v673 = vpack.c.b16 %v498, %v493
    %v674 = vpack.c.b16 %v499, %v494
    %v675 = vpack.c.b16 %v500, %v495
    %v676 = vpack.c.b16 %v506, %v501
    %v677 = vpack.c.b16 %v507, %v502
    %v678 = vpack.c.b16 %v508, %v503
    %v679 = vpack.c.b16 %v509, %v504
    %v680 = vpack.c.b16 %v510, %v505
    %v681 = vpack.c.b16 %v516, %v511
    %v682 = vpack.c.b16 %v517, %v512
    %v683 = vpack.c.b16 %v518, %v513
    %v684 = vpack.c.b16 %v519, %v514
    %v685 = vpack.c.b16 %v520, %v515
    %v686 = vpack.c.b16 %v526, %v521
    %v687 = vpack.c.b16 %v527, %v522
    %v688 = vpack.c.b16 %v528, %v523
    %v689 = vpack.c.b16 %v529, %v524
    %v690 = vpack.c.b16 %v530, %v525
    %v691 = vpack.c.b16 %v536, %v531
    %v692 = vpack.c.b16 %v537, %v532
    %v693 = vpack.c.b16 %v538, %v533
    %v694 = vpack.c.b16 %v539, %v534
    %v695 = vpack.c.b16 %v540, %v535
    %v696 = vpack.c.b16 %v546, %v541
    %v697 = vpack.c.b16 %v547, %v542
    %v698 = vpack.c.b16 %v548, %v543
    %v699 = vpack.c.b16 %v549, %v544
    %v700 = vpack.c.b16 %v550, %v545
    %v701 = vpack.c.b16 %v556, %v551
    %v702 = vpack.c.b16 %v557, %v552
    %v703 = vpack.c.b16 %v558, %v553
    %v704 = vpack.c.b16 %v559, %v554
    %v705 = vpack.c.b16 %v560, %v555
    %v706 = vpack.c.b16 %v566, %v561
    %v707 = vpack.c.b16 %v567, %v562
    %v708 = vpack.c.b16 %v568, %v563
    %v709 = vpack.c.b16 %v569, %v564
    %v710 = vpack.c.b16 %v570, %v565
    %v711 = vpack.c.b16 %v576, %v571
    %v712 = vpack.c.b16 %v577, %v572
    %v713 = vpack.c.b16 %v578, %v573
    %v714 = vpack.c.b16 %v579, %v574
    %v715 = vpack.c.b16 %v580, %v575
    %v716 = vpack.c.b16 %v586, %v581
    %v717 = vpack.c.b16 %v587, %v582
    %v718 = vpack.c.b16 %v588, %v583
    %v719 = vpack.c.b16 %v589, %v584
    %v720 = vpack.c.b16 %v590, %v585
    %v721 = vpack.c.b16 %v596, %v591
    %v722 = vpack.c.b16 %v597, %v592
    %v723 = vpack.c.b16 %v598, %v593
    %v724 = vpack.c.b16 %v599, %v594
    %v725 = vpack.c.b16 %v600, %v595
    %v726 = vpack.c.b16 %v606, %v601
    %v727 = vpack.c.b16 %v607, %v602
    %v728 = vpack.c.b16 %v608, %v603
    %v729 = vpack.c.b16 %v609, %v604
    %v730 = vpack.c.b16 %v610, %v605
    %851 = vmatprep.subr.bf16.mxu0 %v612
    %852 = vmatpush1.bf16.msra.mxu0 %v611
    %853 = vmatprep.subr.bf16.mxu0 %v617
    %854 = vmatpush1.bf16.msra.mxu0 %v616
    %855 = vmatprep.subr.bf16.mxu0 %v622
    %856 = vmatpush1.bf16.msra.mxu0 %v621
    %857 = vmatprep.subr.bf16.mxu0 %v627
    %858 = vmatpush1.bf16.msra.mxu0 %v626
    %859 = vmatprep.subr.bf16.mxu0 %v632
    %860 = vmatpush1.bf16.msra.mxu0 %v631
    %861 = vmatprep.subr.bf16.mxu0 %v637
    %862 = vmatpush1.bf16.msra.mxu0 %v636
    %863 = vmatprep.subr.bf16.mxu0 %v642
    %864 = vmatpush1.bf16.msra.mxu0 %v641
    %865 = vmatprep.subr.bf16.mxu0 %v647
    %866 = vmatpush1.bf16.msra.mxu0 %v646
    %867 = vmatprep.subr.bf16.mxu0 %v652
    %868 = vmatpush1.bf16.msra.mxu0 %v651
    %869 = vmatprep.subr.bf16.mxu0 %v657
    %870 = vmatpush1.bf16.msra.mxu0 %v656
    %871 = vmatprep.subr.bf16.mxu0 %v662
    %872 = vmatpush1.bf16.msra.mxu0 %v661
    %873 = vmatprep.subr.bf16.mxu0 %v667
    %874 = vmatpush1.bf16.msra.mxu0 %v666
    %875 = vmatprep.subr.bf16.mxu0 %v672
    %876 = vmatpush1.bf16.msra.mxu0 %v671
    %877 = vmatprep.subr.bf16.mxu0 %v677
    %878 = vmatpush1.bf16.msra.mxu0 %v676
    %879 = vmatprep.subr.bf16.mxu0 %v682
    %880 = vmatpush1.bf16.msra.mxu0 %v681
    %881 = vmatprep.subr.bf16.mxu0 %v687
    %882 = vmatpush1.bf16.msra.mxu0 %v686
    %883 = vmatprep.mubr.bf16.mxu0 %v222
    %884 = vmatmul.mubr.bf16.gmra.mrb[0].mxu0 %v221
    %v885 = vpop.f32.mrb[0].mxu0
    %v886 = vadd.f32 0.0, %v885
    %v887 = vpop.f32.mrb[0].mxu0
    %v888 = vadd.f32 0.0, %v887
    %v889 = vpop.f32.mrb[0].mxu0
    %v890 = vpop.f32.mrb[0].mxu0
    %891 = vdwg.mxu0
    %892 = vmatprep.subr.bf16.mxu0 %v692
    %893 = vmatpush1.bf16.msra.mxu0 %v691
    %894 = vmatprep.subr.bf16.mxu0 %v697
    %895 = vmatpush1.bf16.msra.mxu0 %v696
    %896 = vmatprep.subr.bf16.mxu0 %v702
    %897 = vmatpush1.bf16.msra.mxu0 %v701
    %898 = vmatprep.subr.bf16.mxu0 %v707
    %899 = vmatpush1.bf16.msra.mxu0 %v706
    %900 = vmatprep.subr.bf16.mxu0 %v712
    %901 = vmatpush1.bf16.msra.mxu0 %v711
    %902 = vmatprep.subr.bf16.mxu0 %v717
    %903 = vmatpush1.bf16.msra.mxu0 %v716
    %904 = vmatprep.subr.bf16.mxu0 %v722
    %905 = vmatpush1.bf16.msra.mxu0 %v721
    %906 = vmatprep.subr.bf16.mxu0 %v727
    %907 = vmatpush1.bf16.msra.mxu0 %v726
    %908 = vmatprep.subr.bf16.mxu0 0
    %909 = vmatpush1.bf16.msra.mxu0 0
    %910 = vmatprep.subr.bf16.mxu0 0
    %911 = vmatpush1.bf16.msra.mxu0 0
    %912 = vmatprep.subr.bf16.mxu0 0
    %913 = vmatpush1.bf16.msra.mxu0 0
    %914 = vmatprep.subr.bf16.mxu0 0
    %915 = vmatpush1.bf16.msra.mxu0 0
    %916 = vmatprep.subr.bf16.mxu0 0
    %917 = vmatpush1.bf16.msra.mxu0 0
    %918 = vmatprep.subr.bf16.mxu0 0
    %919 = vmatpush1.bf16.msra.mxu0 0
    %920 = vmatprep.subr.bf16.mxu0 0
    %921 = vmatpush1.bf16.msra.mxu0 0
    %922 = vmatprep.subr.bf16.mxu0 0
    %923 = vmatpush1.bf16.msra.mxu0 0
    %924 = vmatprep.mubr.bf16.mxu0 0
    %925 = vmatmul.mubr.bf16.gmra.mrb[0].mxu0 %v223
    %v926 = vpop.f32.mrb[0].mxu0
    %v927 = vadd.f32 %v886, %v926
    %v928 = vpop.f32.mrb[0].mxu0
    %v929 = vadd.f32 %v888, %v928
    %v930 = vpop.f32.mrb[0].mxu0
    %v931 = vpop.f32.mrb[0].mxu0
    %932 = vdwg.mxu0
    %933 = vmatprep.subr.bf16.mxu0 %v614
    %934 = vmatpush1.bf16.msra.mxu0 %v613
    %935 = vmatprep.subr.bf16.mxu0 %v619
    %936 = vmatpush1.bf16.msra.mxu0 %v618
    %937 = vmatprep.subr.bf16.mxu0 %v624
    %938 = vmatpush1.bf16.msra.mxu0 %v623
    %939 = vmatprep.subr.bf16.mxu0 %v629
    %940 = vmatpush1.bf16.msra.mxu0 %v628
    %941 = vmatprep.subr.bf16.mxu0 %v634
    %942 = vmatpush1.bf16.msra.mxu0 %v633
    %943 = vmatprep.subr.bf16.mxu0 %v639
    %944 = vmatpush1.bf16.msra.mxu0 %v638
    %945 = vmatprep.subr.bf16.mxu0 %v644
    %946 = vmatpush1.bf16.msra.mxu0 %v643
    %947 = vmatprep.subr.bf16.mxu0 %v649
    %948 = vmatpush1.bf16.msra.mxu0 %v648
    %949 = vmatprep.subr.bf16.mxu0 %v654
    %950 = vmatpush1.bf16.msra.mxu0 %v653
    %951 = vmatprep.subr.bf16.mxu0 %v659
    %952 = vmatpush1.bf16.msra.mxu0 %v658
    %953 = vmatprep.subr.bf16.mxu0 %v664
    %954 = vmatpush1.bf16.msra.mxu0 %v663
    %955 = vmatprep.subr.bf16.mxu0 %v669
    %956 = vmatpush1.bf16.msra.mxu0 %v668
    %957 = vmatprep.subr.bf16.mxu0 %v674
    %958 = vmatpush1.bf16.msra.mxu0 %v673
    %959 = vmatprep.subr.bf16.mxu0 %v679
    %960 = vmatpush1.bf16.msra.mxu0 %v678
    %961 = vmatprep.subr.bf16.mxu0 %v684
    %962 = vmatpush1.bf16.msra.mxu0 %v683
    %963 = vmatprep.subr.bf16.mxu0 %v689
    %964 = vmatpush1.bf16.msra.mxu0 %v688
    %965 = vmatprep.mubr.bf16.mxu0 %v222
    %966 = vmatmul.mubr.bf16.gmra.mrb[0].mxu0 %v221
    %v967 = vpop.f32.mrb[0].mxu0
    %v968 = vadd.f32 0.0, %v967
    %v969 = vpop.f32.mrb[0].mxu0
    %v970 = vadd.f32 0.0, %v969
    %v971 = vpop.f32.mrb[0].mxu0
    %v972 = vpop.f32.mrb[0].mxu0
    %973 = vdwg.mxu0
    %974 = vmatprep.subr.bf16.mxu0 %v694
    %975 = vmatpush1.bf16.msra.mxu0 %v693
    %976 = vmatprep.subr.bf16.mxu0 %v699
    %977 = vmatpush1.bf16.msra.mxu0 %v698
    %978 = vmatprep.subr.bf16.mxu0 %v704
    %979 = vmatpush1.bf16.msra.mxu0 %v703
    %980 = vmatprep.subr.bf16.mxu0 %v709
    %981 = vmatpush1.bf16.msra.mxu0 %v708
    %982 = vmatprep.subr.bf16.mxu0 %v714
    %983 = vmatpush1.bf16.msra.mxu0 %v713
    %984 = vmatprep.subr.bf16.mxu0 %v719
    %985 = vmatpush1.bf16.msra.mxu0 %v718
    %986 = vmatprep.subr.bf16.mxu0 %v724
    %987 = vmatpush1.bf16.msra.mxu0 %v723
    %988 = vmatprep.subr.bf16.mxu0 %v729
    %989 = vmatpush1.bf16.msra.mxu0 %v728
    %990 = vmatprep.subr.bf16.mxu0 0
    %991 = vmatpush1.bf16.msra.mxu0 0
    %992 = vmatprep.subr.bf16.mxu0 0
    %993 = vmatpush1.bf16.msra.mxu0 0
    %994 = vmatprep.subr.bf16.mxu0 0
    %995 = vmatpush1.bf16.msra.mxu0 0
    %996 = vmatprep.subr.bf16.mxu0 0
    %997 = vmatpush1.bf16.msra.mxu0 0
    %998 = vmatprep.subr.bf16.mxu0 0
    %999 = vmatpush1.bf16.msra.mxu0 0
    %1000 = vmatprep.subr.bf16.mxu0 0
    %1001 = vmatpush1.bf16.msra.mxu0 0
    %1002 = vmatprep.subr.bf16.mxu0 0
    %1003 = vmatpush1.bf16.msra.mxu0 0
    %1004 = vmatprep.subr.bf16.mxu0 0
    %1005 = vmatpush1.bf16.msra.mxu0 0
    %1006 = vmatprep.mubr.bf16.mxu0 0
    %1007 = vmatmul.mubr.bf16.gmra.mrb[0].mxu0 %v223
    %v1008 = vpop.f32.mrb[0].mxu0
    %v1009 = vadd.f32 %v968, %v1008
    %v1010 = vpop.f32.mrb[0].mxu0
    %v1011 = vadd.f32 %v970, %v1010
    %v1012 = vpop.f32.mrb[0].mxu0
    %v1013 = vpop.f32.mrb[0].mxu0
    %1014 = vdwg.mxu0
    %1015 = vmatprep.subr.bf16.mxu0 0
    %1016 = vmatpush1.bf16.msra.mxu0 %v615
    %1017 = vmatprep.subr.bf16.mxu0 0
    %1018 = vmatpush1.bf16.msra.mxu0 %v620
    %1019 = vmatprep.subr.bf16.mxu0 0
    %1020 = vmatpush1.bf16.msra.mxu0 %v625
    %1021 = vmatprep.subr.bf16.mxu0 0
    %1022 = vmatpush1.bf16.msra.mxu0 %v630
    %1023 = vmatprep.subr.bf16.mxu0 0
    %1024 = vmatpush1.bf16.msra.mxu0 %v635
    %1025 = vmatprep.subr.bf16.mxu0 0
    %1026 = vmatpush1.bf16.msra.mxu0 %v640
    %1027 = vmatprep.subr.bf16.mxu0 0
    %1028 = vmatpush1.bf16.msra.mxu0 %v645
    %1029 = vmatprep.subr.bf16.mxu0 0
    %1030 = vmatpush1.bf16.msra.mxu0 %v650
    %1031 = vmatprep.subr.bf16.mxu0 0
    %1032 = vmatpush1.bf16.msra.mxu0 %v655
    %1033 = vmatprep.subr.bf16.mxu0 0
    %1034 = vmatpush1.bf16.msra.mxu0 %v660
    %1035 = vmatprep.subr.bf16.mxu0 0
    %1036 = vmatpush1.bf16.msra.mxu0 %v665
    %1037 = vmatprep.subr.bf16.mxu0 0
    %1038 = vmatpush1.bf16.msra.mxu0 %v670
    %1039 = vmatprep.subr.bf16.mxu0 0
    %1040 = vmatpush1.bf16.msra.mxu0 %v675
    %1041 = vmatprep.subr.bf16.mxu0 0
    %1042 = vmatpush1.bf16.msra.mxu0 %v680
    %1043 = vmatprep.subr.bf16.mxu0 0
    %1044 = vmatpush1.bf16.msra.mxu0 %v685
    %1045 = vmatprep.subr.bf16.mxu0 0
    %1046 = vmatpush1.bf16.msra.mxu0 %v690
    %1047 = vmatprep.mubr.bf16.mxu0 %v222
    %1048 = vmatmul.mubr.bf16.gmra.mrb[0].mxu0 %v221
    %v1049 = vpop.f32.mrb[0].mxu0
    %v1050 = vadd.f32 0.0, %v1049
    %v1051 = vpop.f32.mrb[0].mxu0
    %v1052 = vpop.f32.mrb[0].mxu0
    %v1053 = vpop.f32.mrb[0].mxu0
    %1054 = vdwg.mxu0
    %1055 = vmatprep.subr.bf16.mxu0 0
    %1056 = vmatpush1.bf16.msra.mxu0 %v695
    %1057 = vmatprep.subr.bf16.mxu0 0
    %1058 = vmatpush1.bf16.msra.mxu0 %v700
    %1059 = vmatprep.subr.bf16.mxu0 0
    %1060 = vmatpush1.bf16.msra.mxu0 %v705
    %1061 = vmatprep.subr.bf16.mxu0 0
    %1062 = vmatpush1.bf16.msra.mxu0 %v710
    %1063 = vmatprep.subr.bf16.mxu0 0
    %1064 = vmatpush1.bf16.msra.mxu0 %v715
    %1065 = vmatprep.subr.bf16.mxu0 0
    %1066 = vmatpush1.bf16.msra.mxu0 %v720
    %1067 = vmatprep.subr.bf16.mxu0 0
    %1068 = vmatpush1.bf16.msra.mxu0 %v725
    %1069 = vmatprep.subr.bf16.mxu0 0
    %1070 = vmatpush1.bf16.msra.mxu0 %v730
    %1071 = vmatprep.subr.bf16.mxu0 0
    %1072 = vmatpush1.bf16.msra.mxu0 0
    %1073 = vmatprep.subr.bf16.mxu0 0
    %1074 = vmatpush1.bf16.msra.mxu0 0
    %1075 = vmatprep.subr.bf16.mxu0 0
    %1076 = vmatpush1.bf16.msra.mxu0 0
    %1077 = vmatprep.subr.bf16.mxu0 0
    %1078 = vmatpush1.bf16.msra.mxu0 0
    %1079 = vmatprep.subr.bf16.mxu0 0
    %1080 = vmatpush1.bf16.msra.mxu0 0
    %1081 = vmatprep.subr.bf16.mxu0 0
    %1082 = vmatpush1.bf16.msra.mxu0 0
    %1083 = vmatprep.subr.bf16.mxu0 0
    %1084 = vmatpush1.bf16.msra.mxu0 0
    %1085 = vmatprep.subr.bf16.mxu0 0
    %1086 = vmatpush1.bf16.msra.mxu0 0
    %1087 = vmatprep.mubr.bf16.mxu0 0
    %1088 = vmatmul.mubr.bf16.gmra.mrb[0].mxu0 %v223
    %v1089 = vpop.f32.mrb[0].mxu0
    %v1090 = vadd.f32 %v1050, %v1089
    %v1091 = vpop.f32.mrb[0].mxu0
    %v1092 = vpop.f32.mrb[0].mxu0
    %v1093 = vpop.f32.mrb[0].mxu0
    %1094 = vdwg.mxu0
    %v1095 = vadd.f32 %v65, %v927
    %v1096 = vadd.f32 %v66, %v929
    %v1097 = vadd.f32 %v67, %v1009
    %v1098 = vadd.f32 %v68, %v1011
    %v1099 = vadd.f32 %v69, %v1090
    %1100 = vst [vmem:[#allocation2] sm:$0xff] %v1095
    %1101 = vst [vmem:[#allocation2 + $0x8] sm:$0xff] %v1096
    %1102 = vst [vmem:[#allocation2 + $0x10] sm:$0xff] %v1097
    %1103 = vst [vmem:[#allocation2 + $0x18] sm:$0xff] %v1098
    %1104 = vst [vmem:[#allocation2 + $0x20] sm:$0xff] %v1099
    // Predicated region
    $region34: #{tpu_custom_call.1} parent=1 // pred_check
      %p1105 = pneg %p56
    $region35: #{tpu_custom_call.1} parent=1 // pred_check_branch
      %1107 = sbr.rel (%p1105) target = $region37
    $region36: #{tpu_custom_call.1} parent=1 // pred_region
      %v1108 = vld [vmem:[#allocation2] sm:$0xff]
      %v1109 = vld [vmem:[#allocation2 + $0x8] sm:$0xff]
      %v1110 = vld [vmem:[#allocation2 + $0x10] sm:$0xff]
      %v1111 = vld [vmem:[#allocation2 + $0x18] sm:$0xff]
      %v1112 = vld [vmem:[#allocation2 + $0x20] sm:$0xff]
      %v1113 = vld [vmem:[%s3] sm:$0x1f]
      %v1115 = vlaneseq
      %v1116 = vshrl.u32 %v1115, 7
      %v1117 = vsub.s32 0, %v1116
      %v1118 = vrot.slane %v1113, %v1117
      %v1119 = vlaneseq
      %v1120 = vshrl.u32 %v1119, 7
      %v1121 = vsub.s32 1, %v1120
      %v1122 = vrot.slane %v1113, %v1121
      %v1123 = vlaneseq
      %v1124 = vshrl.u32 %v1123, 7
      %v1125 = vsub.s32 2, %v1124
      %v1126 = vrot.slane %v1113, %v1125
      %v1127 = vlaneseq
      %v1128 = vshrl.u32 %v1127, 7
      %v1129 = vsub.s32 3, %v1128
      %v1130 = vrot.slane %v1113, %v1129
      %v1131 = vlaneseq
      %v1132 = vshrl.u32 %v1131, 7
      %v1133 = vsub.s32 4, %v1132
      %v1134 = vrot.slane %v1113, %v1133
      %v1140 = vadd.f32 %v1108, %v1118
      %v1141 = vadd.f32 %v1109, %v1122
      %v1142 = vadd.f32 %v1110, %v1126
      %v1143 = vadd.f32 %v1111, %v1130
      %v1144 = vadd.f32 %v1112, %v1134
      %v1145 = vmul.f32 %v1140, 0.5
      %v1146 = vtanh.pop %v1145
      %v1147 = vmul.f32 %v1146, 0.5
      %v1148 = vadd.f32 %v1147, 0.5
      %v1149 = vmul.f32 %v1141, 0.5
      %v1150 = vtanh.pop %v1149
      %v1151 = vmul.f32 %v1150, 0.5
      %v1152 = vadd.f32 %v1151, 0.5
      %v1153 = vtanh.pop %v1142
      %v1154 = vmul.f32 %v1143, 0.5
      %v1155 = vmul.f32 %v1144, 0.5
      %v1156 = vtanh.pop %v1154
      %v1157 = vtanh.pop %v1155
      %v1158 = vmul.f32 %v1156, 0.5
      %v1159 = vmul.f32 %v1157, 0.5
      %v1160 = vadd.f32 %v1158, 0.5
      %v1161 = vadd.f32 %v1159, 0.5
      %v1162 = vld [vmem:[#allocation6] sm:$0xff]
      %v1163 = vld [vmem:[#allocation6 + $0x8] sm:$0xff]
      %v1164 = vmul.f32 %v1160, %v1162
      %v1165 = vmul.f32 %v1161, %v1163
      %v1166 = vadd.f32 %v1164, %v1165
      %v1167 = vmul.f32 %v1148, %v1153
      %v1168 = vadd.f32 %v1167, %v1166
      %v1169 = vtanh.pop %v1168
      %v1170 = vmul.f32 %v1152, %v1169
      %1171 = vst [vmem:[#allocation9] sm:$0xff] %v1170
      %1172 = vst [vmem:[#allocation9 + $0x8] sm:$0xff] %v1168
    $region37: #{tpu_custom_call.1} parent=1 // pred_fallthru
      _
    // Predicated region
    $region38: #{tpu_custom_call.1} parent=1 // pred_check
      _
    $region39: #{tpu_custom_call.1} parent=1 // pred_check_branch
      %1174 = sbr.rel (0) target = $region41
    $region40: #{tpu_custom_call.1} parent=1 // pred_region
      %s1176 = ssub.s32 256, 256
      %1177 = vsyncadd [#allocation5], %s1176
      %s1179 = sshll.u32 [#allocation9], 4
      %s1180 = int_to_ptr.vmem [resolvable:$true] %s1179
      %1182 = dma.vmem_to_hbm [thread:$0]  %s1180, 256, %s4, [#allocation5]
    $region41: #{tpu_custom_call.1} parent=1 // pred_fallthru
      _
    // Predicated region
    $region42: #{tpu_custom_call.1} parent=1 // pred_check
      _
    $region43: #{tpu_custom_call.1} parent=1 // pred_check_branch
      %1184 = sbr.rel (0) target = $region45
    $region44: #{tpu_custom_call.1} parent=1 // pred_region
      %1185 = dma.done [#allocation5], 256
    $region45: #{tpu_custom_call.1} parent=1 // pred_fallthru
      _
    %1186 = vsyncpa [#allocation4], 1
    %1187 = vsyncpa [#allocation7], 1
    %1188 = vsyncpa [#allocation5], 1

// kernel: tpu_custom_call.1
$region0: #{tpu_custom_call.1}
  #allocation0 [shape = 'u32[]', space=smem, size = 0x4, offset = 0x4, fixed_abs, tag = 'smem constant byte address 0x4 - core index']
  #allocation1 [shape = 'u32[144,128]{1,0:T(1,128)}', space=vmem, size = 0x12000, scoped, tag = 'internal scratch']
  #allocation2 [shape = 'f32[8,640]{1,0:T(8,128)}', space=vmem, size = 0x5000, scoped, tag = 'scratch operand']
  %s0 = inlined_call_operand.hbm [shape: bf16[8,384], index: 0, kind: input, shape index: {}]
  %s1 = inlined_call_operand.hbm [shape: f32[8,256], index: 1, kind: input, shape index: {}]
  %s2 = inlined_call_operand.hbm [shape: bf16[384,640], index: 2, kind: input, shape index: {}]
  %s3 = inlined_call_operand.vmem [shape: f32[1,640], index: 3, kind: input, shape index: {}]
  %s4 = inlined_call_operand.hbm [shape: f32[8,256], index: 4, kind: output, shape index: {}]
  %s5 = sld [smem:[#allocation0]]
  $region46: #{tpu_custom_call.1} parent=0
    _
  %s7 = ssub.s32 1, %s5
  %s8 = scalar_select 0, %s7, %s5
  $region1: #{tpu_custom_call.1} parent=0
    #allocation3 [shape = 'u8[6144]{0}', space=vmem, size = 0x1800, scoped, tag = 'input window, operand 0, single buffered']
    #allocation4 [shape = 's32[1]{0}', space=sflag, size = 0x4, scoped, tag = 'scoped memory for tpu_custom_call.1']
    #allocation5 [shape = 's32[1]{0}', space=sflag, size = 0x4, scoped, tag = 'scoped memory for tpu_custom_call.1']
    #allocation6 [shape = 'u8[8192]{0}', space=vmem, size = 0x2000, scoped, tag = 'input window, operand 1, single buffered']
    #allocation7 [shape = 's32[1]{0}', space=sflag, size = 0x4, scoped, tag = 'scoped memory for tpu_custom_call.1']
    #allocation8 [shape = 'u8[491520]{0}', space=vmem, size = 0x78000, scoped, tag = 'input window, operand 2, single buffered']
    #allocation9 [shape = 'u8[8192]{0}', space=vmem, size = 0x2000, scoped, tag = 'output window, operand 0, single buffered']
    %9 = vsyncpa [#allocation4], 0
    %10 = vsyncpa [#allocation7], 0
    %11 = vsyncpa [#allocation5], 0
    // Predicated region
    $region2: #{tpu_custom_call.1} parent=1 // pred_check
      _
    $region3: #{tpu_custom_call.1} parent=1 // pred_check_branch
      %13 = sbr.rel (0) target = $region5
    $region4: #{tpu_custom_call.1} parent=1 // pred_region
      %s15 = ssub.s32 192, 192
      %16 = vsyncadd [#allocation4], %s15
      %s18 = sshll.u32 [#allocation3], 4
      %s19 = int_to_ptr.vmem [resolvable:$true] %s18
      %21 = dma.hbm_to_vmem [thread:$0]  %s0, 192, %s19, [#allocation4]
    $region5: #{tpu_custom_call.1} parent=1 // pred_fallthru
      _
    // Predicated region
    $region6: #{tpu_custom_call.1} parent=1 // pred_check
      _
    $region7: #{tpu_custom_call.1} parent=1 // pred_check_branch
      %23 = sbr.rel (0) target = $region9
    $region8: #{tpu_custom_call.1} parent=1 // pred_region
      %s25 = ssub.s32 256, 256
      %26 = vsyncadd [#allocation7], %s25
      %s28 = sshll.u32 [#allocation6], 4
      %s29 = int_to_ptr.vmem [resolvable:$true] %s28
      %31 = dma.hbm_to_vmem [thread:$0]  %s1, 256, %s29, [#allocation7]
    $region9: #{tpu_custom_call.1} parent=1 // pred_fallthru
      _
    // Predicated region
    $region10: #{tpu_custom_call.1} parent=1 // pred_check
      _
    $region11: #{tpu_custom_call.1} parent=1 // pred_check_branch
      %33 = sbr.rel (0) target = $region13
    $region12: #{tpu_custom_call.1} parent=1 // pred_region
      %s35 = ssub.s32 15360, 15360
      %36 = vsyncadd [#allocation7], %s35
      %s37 = sshll.u32 [#allocation8], 4
      %s38 = int_to_ptr.vmem [resolvable:$true] %s37
      %43 = dma.hbm_to_vmem [thread:$0]  %s2, 15360, %s38, [#allocation7], 320, 320, 20
    $region13: #{tpu_custom_call.1} parent=1 // pred_fallthru
      _
    // Predicated region
    $region14: #{tpu_custom_call.1} parent=1 // pred_check
      _
    $region15: #{tpu_custom_call.1} parent=1 // pred_check_branch
      %45 = sbr.rel (0) target = $region17
    $region16: #{tpu_custom_call.1} parent=1 // pred_region
      _
    $region17: #{tpu_custom_call.1} parent=1 // pred_fallthru
      _
    // Predicated region
    $region18: #{tpu_custom_call.1} parent=1 // pred_check
      _
    $region19: #{tpu_custom_call.1} parent=1 // pred_check_branch
      %47 = sbr.rel (0) target = $region21
    $region20: #{tpu_custom_call.1} parent=1 // pred_region
      %48 = dma.done [#allocation4], 192
    $region21: #{tpu_custom_call.1} parent=1 // pred_fallthru
      _
    // Predicated region
    $region22: #{tpu_custom_call.1} parent=1 // pred_check
      _
    $region23: #{tpu_custom_call.1} parent=1 // pred_check_branch
      %50 = sbr.rel (0) target = $region25
    $region24: #{tpu_custom_call.1} parent=1 // pred_region
      %51 = dma.done [#allocation7], 256
    $region25: #{tpu_custom_call.1} parent=1 // pred_fallthru
      _
    // Predicated region
    $region26: #{tpu_custom_call.1} parent=1 // pred_check
      _
    $region27: #{tpu_custom_call.1} parent=1 // pred_check_branch
      %53 = sbr.rel (0) target = $region29
    $region28: #{tpu_custom_call.1} parent=1 // pred_region
      %54 = dma.done [#allocation7], 15360
    $region29: #{tpu_custom_call.1} parent=1 // pred_fallthru
      _
    %p56 = scmp.eq.s32.totalorder 0, 0
    // Predicated region
    $region30: #{tpu_custom_call.1} parent=1 // pred_check
      %p57 = pneg %p56
    $region31: #{tpu_custom_call.1} parent=1 // pred_check_branch
      %59 = sbr.rel (%p57) target = $region33
    $region32: #{tpu_custom_call.1} parent=1 // pred_region
      %60 = vst [vmem:[#allocation2] sm:$0xff] 0.0
      %61 = vst [vmem:[#allocation2 + $0x8] sm:$0xff] 0.0
      %62 = vst [vmem:[#allocation2 + $0x10] sm:$0xff] 0.0
      %63 = vst [vmem:[#allocation2 + $0x18] sm:$0xff] 0.0
      %64 = vst [vmem:[#allocation2 + $0x20] sm:$0xff] 0.0
    $region33: #{tpu_custom_call.1} parent=1 // pred_fallthru
      _
    %v65 = vld [vmem:[#allocation2] sm:$0xff]
    %v66 = vld [vmem:[#allocation2 + $0x8] sm:$0xff]
    %v67 = vld [vmem:[#allocation2 + $0x10] sm:$0xff]
    %v68 = vld [vmem:[#allocation2 + $0x18] sm:$0xff]
    %v69 = vld [vmem:[#allocation2 + $0x20] sm:$0xff]
    %v70 = vld [vmem:[#allocation3] sm:$0xff]
    %v71 = vld [vmem:[#allocation3 + $0x8] sm:$0xf]
    %v72 = vld [vmem:[#allocation8] sm:$0xff]
    %v73 = vld [vmem:[#allocation8 + $0x8] sm:$0xff]
    %v74 = vld [vmem:[#allocation8 + $0x10] sm:$0xf]
    %v75 = vld [vmem:[#allocation8 + $0x14] sm:$0xff]
    %v76 = vld [vmem:[#allocation8 + $0x1c] sm:$0xff]
    %v77 = vld [vmem:[#allocation8 + $0x24] sm:$0xf]
    %v78 = vld [vmem:[#allocation8 + $0x28] sm:$0xff]
    %v79 = vld [vmem:[#allocation8 + $0x30] sm:$0xff]
    %v80 = vld [vmem:[#allocation8 + $0x38] sm:$0xf]
    %v81 = vld [vmem:[#allocation8 + $0x3c] sm:$0xff]
    %v82 = vld [vmem:[#allocation8 + $0x44] sm:$0xff]
    %v83 = vld [vmem:[#allocation8 + $0x4c] sm:$0xf]
    %v84 = vld [vmem:[#allocation8 + $0x50] sm:$0xff]
    %v85 = vld [vmem:[#allocation8 + $0x58] sm:$0xff]
    %v86 = vld [vmem:[#allocation8 + $0x60] sm:$0xf]
    %v87 = vld [vmem:[#allocation8 + $0x64] sm:$0xff]
    %v88 = vld [vmem:[#allocation8 + $0x6c] sm:$0xff]
    %v89 = vld [vmem:[#allocation8 + $0x74] sm:$0xf]
    %v90 = vld [vmem:[#allocation8 + $0x78] sm:$0xff]
    %v91 = vld [vmem:[#allocation8 + $0x80] sm:$0xff]
    %v92 = vld [vmem:[#allocation8 + $0x88] sm:$0xf]
    %v93 = vld [vmem:[#allocation8 + $0x8c] sm:$0xff]
    %v94 = vld [vmem:[#allocation8 + $0x94] sm:$0xff]
    %v95 = vld [vmem:[#allocation8 + $0x9c] sm:$0xf]
    %v96 = vld [vmem:[#allocation8 + $0xa0] sm:$0xff]
    %v97 = vld [vmem:[#allocation8 + $0xa8] sm:$0xff]
    %v98 = vld [vmem:[#allocation8 + $0xb0] sm:$0xf]
    %v99 = vld [vmem:[#allocation8 + $0xb4] sm:$0xff]
    %v100 = vld [vmem:[#allocation8 + $0xbc] sm:$0xff]
    %v101 = vld [vmem:[#allocation8 + $0xc4] sm:$0xf]
    %v102 = vld [vmem:[#allocation8 + $0xc8] sm:$0xff]
    %v103 = vld [vmem:[#allocation8 + $0xd0] sm:$0xff]
    %v104 = vld [vmem:[#allocation8 + $0xd8] sm:$0xf]
    %v105 = vld [vmem:[#allocation8 + $0xdc] sm:$0xff]
    %v106 = vld [vmem:[#allocation8 + $0xe4] sm:$0xff]
    %v107 = vld [vmem:[#allocation8 + $0xec] sm:$0xf]
    %v108 = vld [vmem:[#allocation8 + $0xf0] sm:$0xff]
    %v109 = vld [vmem:[#allocation8 + $0xf8] sm:$0xff]
    %v110 = vld [vmem:[#allocation8 + $0x100] sm:$0xf]
    %v111 = vld [vmem:[#allocation8 + $0x104] sm:$0xff]
    %v112 = vld [vmem:[#allocation8 + $0x10c] sm:$0xff]
    %v113 = vld [vmem:[#allocation8 + $0x114] sm:$0xf]
    %v114 = vld [vmem:[#allocation8 + $0x118] sm:$0xff]
    %v115 = vld [vmem:[#allocation8 + $0x120] sm:$0xff]
    %v116 = vld [vmem:[#allocation8 + $0x128] sm:$0xf]
    %v117 = vld [vmem:[#allocation8 + $0x12c] sm:$0xff]
    %v118 = vld [vmem:[#allocation8 + $0x134] sm:$0xff]
    %v119 = vld [vmem:[#allocation8 + $0x13c] sm:$0xf]
    %v120 = vld [vmem:[#allocation8 + $0x140] sm:$0xff]
    %v121 = vld [vmem:[#allocation8 + $0x148] sm:$0xff]
    %v122 = vld [vmem:[#allocation8 + $0x150] sm:$0xf]
    %v123 = vld [vmem:[#allocation8 + $0x154] sm:$0xff]
    %v124 = vld [vmem:[#allocation8 + $0x15c] sm:$0xff]
    %v125 = vld [vmem:[#allocation8 + $0x164] sm:$0xf]
    %v126 = vld [vmem:[#allocation8 + $0x168] sm:$0xff]
    %v127 = vld [vmem:[#allocation8 + $0x170] sm:$0xff]
    %v128 = vld [vmem:[#allocation8 + $0x178] sm:$0xf]
    %v129 = vld [vmem:[#allocation8 + $0x17c] sm:$0xff]
    %v130 = vld [vmem:[#allocation8 + $0x184] sm:$0xff]
    %v131 = vld [vmem:[#allocation8 + $0x18c] sm:$0xf]
    %v132 = vld [vmem:[#allocation8 + $0x190] sm:$0xff]
    %v133 = vld [vmem:[#allocation8 + $0x198] sm:$0xff]
    %v134 = vld [vmem:[#allocation8 + $0x1a0] sm:$0xf]
    %v135 = vld [vmem:[#allocation8 + $0x1a4] sm:$0xff]
    %v136 = vld [vmem:[#allocation8 + $0x1ac] sm:$0xff]
    %v137 = vld [vmem:[#allocation8 + $0x1b4] sm:$0xf]
    %v138 = vld [vmem:[#allocation8 + $0x1b8] sm:$0xff]
    %v139 = vld [vmem:[#allocation8 + $0x1c0] sm:$0xff]
    %v140 = vld [vmem:[#allocation8 + $0x1c8] sm:$0xf]
    %v141 = vld [vmem:[#allocation8 + $0x1cc] sm:$0xff]
    %v142 = vld [vmem:[#allocation8 + $0x1d4] sm:$0xff]
    %v143 = vld [vmem:[#allocation8 + $0x1dc] sm:$0xf]
    %v144 = vld [vmem:[#allocation8 + $0x1e0] sm:$0xff]
    %v145 = vld [vmem:[#allocation8 + $0x1e8] sm:$0xff]
    %v146 = vld [vmem:[#allocation8 + $0x1f0] sm:$0xf]
    %v147 = vld [vmem:[#allocation8 + $0x1f4] sm:$0xff]
    %v148 = vld [vmem:[#allocation8 + $0x1fc] sm:$0xff]
    %v149 = vld [vmem:[#allocation8 + $0x204] sm:$0xf]
    %v150 = vld [vmem:[#allocation8 + $0x208] sm:$0xff]
    %v151 = vld [vmem:[#allocation8 + $0x210] sm:$0xff]
    %v152 = vld [vmem:[#allocation8 + $0x218] sm:$0xf]
    %v153 = vld [vmem:[#allocation8 + $0x21c] sm:$0xff]
    %v154 = vld [vmem:[#allocation8 + $0x224] sm:$0xff]
    %v155 = vld [vmem:[#allocation8 + $0x22c] sm:$0xf]
    %v156 = vld [vmem:[#allocation8 + $0x230] sm:$0xff]
    %v157 = vld [vmem:[#allocation8 + $0x238] sm:$0xff]
    %v158 = vld [vmem:[#allocation8 + $0x240] sm:$0xf]
    %v159 = vld [vmem:[#allocation8 + $0x244] sm:$0xff]
    %v160 = vld [vmem:[#allocation8 + $0x24c] sm:$0xff]
    %v161 = vld [vmem:[#allocation8 + $0x254] sm:$0xf]
    %v162 = vld [vmem:[#allocation8 + $0x258] sm:$0xff]
    %v163 = vld [vmem:[#allocation8 + $0x260] sm:$0xff]
    %v164 = vld [vmem:[#allocation8 + $0x268] sm:$0xf]
    %v165 = vld [vmem:[#allocation8 + $0x26c] sm:$0xff]
    %v166 = vld [vmem:[#allocation8 + $0x274] sm:$0xff]
    %v167 = vld [vmem:[#allocation8 + $0x27c] sm:$0xf]
    %v168 = vld [vmem:[#allocation8 + $0x280] sm:$0xff]
    %v169 = vld [vmem:[#allocation8 + $0x288] sm:$0xff]
    %v170 = vld [vmem:[#allocation8 + $0x290] sm:$0xf]
    %v171 = vld [vmem:[#allocation8 + $0x294] sm:$0xff]
    %v172 = vld [vmem:[#allocation8 + $0x29c] sm:$0xff]
    %v173 = vld [vmem:[#allocation8 + $0x2a4] sm:$0xf]
    %v174 = vld [vmem:[#allocation8 + $0x2a8] sm:$0xff]
    %v175 = vld [vmem:[#allocation8 + $0x2b0] sm:$0xff]
    %v176 = vld [vmem:[#allocation8 + $0x2b8] sm:$0xf]
    %v177 = vld [vmem:[#allocation8 + $0x2bc] sm:$0xff]
    %v178 = vld [vmem:[#allocation8 + $0x2c4] sm:$0xff]
    %v179 = vld [vmem:[#allocation8 + $0x2cc] sm:$0xf]
    %v180 = vld [vmem:[#allocation8 + $0x2d0] sm:$0xff]
    %v181 = vld [vmem:[#allocation8 + $0x2d8] sm:$0xff]
    %v182 = vld [vmem:[#allocation8 + $0x2e0] sm:$0xf]
    %v183 = vld [vmem:[#allocation8 + $0x2e4] sm:$0xff]
    %v184 = vld [vmem:[#allocation8 + $0x2ec] sm:$0xff]
    %v185 = vld [vmem:[#allocation8 + $0x2f4] sm:$0xf]
    %v186 = vld [vmem:[#allocation8 + $0x2f8] sm:$0xff]
    %v187 = vld [vmem:[#allocation8 + $0x300] sm:$0xff]
    %v188 = vld [vmem:[#allocation8 + $0x308] sm:$0xf]
    %v189 = vld [vmem:[#allocation8 + $0x30c] sm:$0xff]
    %v190 = vld [vmem:[#allocation8 + $0x314] sm:$0xff]
    %v191 = vld [vmem:[#allocation8 + $0x31c] sm:$0xf]
    %v192 = vld [vmem:[#allocation8 + $0x320] sm:$0xff]
    %v193 = vld [vmem:[#allocation8 + $0x328] sm:$0xff]
    %v194 = vld [vmem:[#allocation8 + $0x330] sm:$0xf]
    %v195 = vld [vmem:[#allocation8 + $0x334] sm:$0xff]
    %v196 = vld [vmem:[#allocation8 + $0x33c] sm:$0xff]
    %v197 = vld [vmem:[#allocation8 + $0x344] sm:$0xf]
    %v198 = vld [vmem:[#allocation8 + $0x348] sm:$0xff]
    %v199 = vld [vmem:[#allocation8 + $0x350] sm:$0xff]
    %v200 = vld [vmem:[#allocation8 + $0x358] sm:$0xf]
    %v201 = vld [vmem:[#allocation8 + $0x35c] sm:$0xff]
    %v202 = vld [vmem:[#allocation8 + $0x364] sm:$0xff]
    %v203 = vld [vmem:[#allocation8 + $0x36c] sm:$0xf]
    %v204 = vld [vmem:[#allocation8 + $0x370] sm:$0xff]
    %v205 = vld [vmem:[#allocation8 + $0x378] sm:$0xff]
    %v206 = vld [vmem:[#allocation8 + $0x380] sm:$0xf]
    %v207 = vld [vmem:[#allocation8 + $0x384] sm:$0xff]
    %v208 = vld [vmem:[#allocation8 + $0x38c] sm:$0xff]
    %v209 = vld [vmem:[#allocation8 + $0x394] sm:$0xf]
    %v210 = vld [vmem:[#allocation8 + $0x398] sm:$0xff]
    %v211 = vld [vmem:[#allocation8 + $0x3a0] sm:$0xff]
    %v212 = vld [vmem:[#allocation8 + $0x3a8] sm:$0xf]
    %v213 = vld [vmem:[#allocation8 + $0x3ac] sm:$0xff]
    %v214 = vld [vmem:[#allocation8 + $0x3b4] sm:$0xff]
    %v215 = vld [vmem:[#allocation8 + $0x3bc] sm:$0xf]
    %v218 = vunpack.c.l.b16 %v70
    %v219 = vunpack.c.h.b16 %v70
    %v220 = vunpack.c.l.b16 %v71
    %v221 = vpack.c.b16 %v218, %v218
    %v222 = vpack.c.b16 %v219, %v219
    %v223 = vpack.c.b16 %v220, %v220
    %v371 = vunpack.c.l.b16 %v72
    %v372 = vunpack.c.h.b16 %v72
    %v373 = vunpack.c.l.b16 %v73
    %v374 = vunpack.c.h.b16 %v73
    %v375 = vunpack.c.l.b16 %v74
    %v376 = vunpack.c.l.b16 %v75
    %v377 = vunpack.c.h.b16 %v75
    %v378 = vunpack.c.l.b16 %v76
    %v379 = vunpack.c.h.b16 %v76
    %v380 = vunpack.c.l.b16 %v77
    %v381 = vunpack.c.l.b16 %v78
    %v382 = vunpack.c.h.b16 %v78
    %v383 = vunpack.c.l.b16 %v79
    %v384 = vunpack.c.h.b16 %v79
    %v385 = vunpack.c.l.b16 %v80
    %v386 = vunpack.c.l.b16 %v81
    %v387 = vunpack.c.h.b16 %v81
    %v388 = vunpack.c.l.b16 %v82
    %v389 = vunpack.c.h.b16 %v82
    %v390 = vunpack.c.l.b16 %v83
    %v391 = vunpack.c.l.b16 %v84
    %v392 = vunpack.c.h.b16 %v84
    %v393 = vunpack.c.l.b16 %v85
    %v394 = vunpack.c.h.b16 %v85
    %v395 = vunpack.c.l.b16 %v86
    %v396 = vunpack.c.l.b16 %v87
    %v397 = vunpack.c.h.b16 %v87
    %v398 = vunpack.c.l.b16 %v88
    %v399 = vunpack.c.h.b16 %v88
    %v400 = vunpack.c.l.b16 %v89
    %v401 = vunpack.c.l.b16 %v90
    %v402 = vunpack.c.h.b16 %v90
    %v403 = vunpack.c.l.b16 %v91
    %v404 = vunpack.c.h.b16 %v91
    %v405 = vunpack.c.l.b16 %v92
    %v406 = vunpack.c.l.b16 %v93
    %v407 = vunpack.c.h.b16 %v93
    %v408 = vunpack.c.l.b16 %v94
    %v409 = vunpack.c.h.b16 %v94
    %v410 = vunpack.c.l.b16 %v95
    %v411 = vunpack.c.l.b16 %v96
    %v412 = vunpack.c.h.b16 %v96
    %v413 = vunpack.c.l.b16 %v97
    %v414 = vunpack.c.h.b16 %v97
    %v415 = vunpack.c.l.b16 %v98
    %v416 = vunpack.c.l.b16 %v99
    %v417 = vunpack.c.h.b16 %v99
    %v418 = vunpack.c.l.b16 %v100
    %v419 = vunpack.c.h.b16 %v100
    %v420 = vunpack.c.l.b16 %v101
    %v421 = vunpack.c.l.b16 %v102
    %v422 = vunpack.c.h.b16 %v102
    %v423 = vunpack.c.l.b16 %v103
    %v424 = vunpack.c.h.b16 %v103
    %v425 = vunpack.c.l.b16 %v104
    %v426 = vunpack.c.l.b16 %v105
    %v427 = vunpack.c.h.b16 %v105
    %v428 = vunpack.c.l.b16 %v106
    %v429 = vunpack.c.h.b16 %v106
    %v430 = vunpack.c.l.b16 %v107
    %v431 = vunpack.c.l.b16 %v108
    %v432 = vunpack.c.h.b16 %v108
    %v433 = vunpack.c.l.b16 %v109
    %v434 = vunpack.c.h.b16 %v109
    %v435 = vunpack.c.l.b16 %v110
    %v436 = vunpack.c.l.b16 %v111
    %v437 = vunpack.c.h.b16 %v111
    %v438 = vunpack.c.l.b16 %v112
    %v439 = vunpack.c.h.b16 %v112
    %v440 = vunpack.c.l.b16 %v113
    %v441 = vunpack.c.l.b16 %v114
    %v442 = vunpack.c.h.b16 %v114
    %v443 = vunpack.c.l.b16 %v115
    %v444 = vunpack.c.h.b16 %v115
    %v445 = vunpack.c.l.b16 %v116
    %v446 = vunpack.c.l.b16 %v117
    %v447 = vunpack.c.h.b16 %v117
    %v448 = vunpack.c.l.b16 %v118
    %v449 = vunpack.c.h.b16 %v118
    %v450 = vunpack.c.l.b16 %v119
    %v451 = vunpack.c.l.b16 %v120
    %v452 = vunpack.c.h.b16 %v120
    %v453 = vunpack.c.l.b16 %v121
    %v454 = vunpack.c.h.b16 %v121
    %v455 = vunpack.c.l.b16 %v122
    %v456 = vunpack.c.l.b16 %v123
    %v457 = vunpack.c.h.b16 %v123
    %v458 = vunpack.c.l.b16 %v124
    %v459 = vunpack.c.h.b16 %v124
    %v460 = vunpack.c.l.b16 %v125
    %v461 = vunpack.c.l.b16 %v126
    %v462 = vunpack.c.h.b16 %v126
    %v463 = vunpack.c.l.b16 %v127
    %v464 = vunpack.c.h.b16 %v127
    %v465 = vunpack.c.l.b16 %v128
    %v466 = vunpack.c.l.b16 %v129
    %v467 = vunpack.c.h.b16 %v129
    %v468 = vunpack.c.l.b16 %v130
    %v469 = vunpack.c.h.b16 %v130
    %v470 = vunpack.c.l.b16 %v131
    %v471 = vunpack.c.l.b16 %v132
    %v472 = vunpack.c.h.b16 %v132
    %v473 = vunpack.c.l.b16 %v133
    %v474 = vunpack.c.h.b16 %v133
    %v475 = vunpack.c.l.b16 %v134
    %v476 = vunpack.c.l.b16 %v135
    %v477 = vunpack.c.h.b16 %v135
    %v478 = vunpack.c.l.b16 %v136
    %v479 = vunpack.c.h.b16 %v136
    %v480 = vunpack.c.l.b16 %v137
    %v481 = vunpack.c.l.b16 %v138
    %v482 = vunpack.c.h.b16 %v138
    %v483 = vunpack.c.l.b16 %v139
    %v484 = vunpack.c.h.b16 %v139
    %v485 = vunpack.c.l.b16 %v140
    %v486 = vunpack.c.l.b16 %v141
    %v487 = vunpack.c.h.b16 %v141
    %v488 = vunpack.c.l.b16 %v142
    %v489 = vunpack.c.h.b16 %v142
    %v490 = vunpack.c.l.b16 %v143
    %v491 = vunpack.c.l.b16 %v144
    %v492 = vunpack.c.h.b16 %v144
    %v493 = vunpack.c.l.b16 %v145
    %v494 = vunpack.c.h.b16 %v145
    %v495 = vunpack.c.l.b16 %v146
    %v496 = vunpack.c.l.b16 %v147
    %v497 = vunpack.c.h.b16 %v147
    %v498 = vunpack.c.l.b16 %v148
    %v499 = vunpack.c.h.b16 %v148
    %v500 = vunpack.c.l.b16 %v149
    %v501 = vunpack.c.l.b16 %v150
    %v502 = vunpack.c.h.b16 %v150
    %v503 = vunpack.c.l.b16 %v151
    %v504 = vunpack.c.h.b16 %v151
    %v505 = vunpack.c.l.b16 %v152
    %v506 = vunpack.c.l.b16 %v153
    %v507 = vunpack.c.h.b16 %v153
    %v508 = vunpack.c.l.b16 %v154
    %v509 = vunpack.c.h.b16 %v154
    %v510 = vunpack.c.l.b16 %v155
    %v511 = vunpack.c.l.b16 %v156
    %v512 = vunpack.c.h.b16 %v156
    %v513 = vunpack.c.l.b16 %v157
    %v514 = vunpack.c.h.b16 %v157
    %v515 = vunpack.c.l.b16 %v158
    %v516 = vunpack.c.l.b16 %v159
    %v517 = vunpack.c.h.b16 %v159
    %v518 = vunpack.c.l.b16 %v160
    %v519 = vunpack.c.h.b16 %v160
    %v520 = vunpack.c.l.b16 %v161
    %v521 = vunpack.c.l.b16 %v162
    %v522 = vunpack.c.h.b16 %v162
    %v523 = vunpack.c.l.b16 %v163
    %v524 = vunpack.c.h.b16 %v163
    %v525 = vunpack.c.l.b16 %v164
    %v526 = vunpack.c.l.b16 %v165
    %v527 = vunpack.c.h.b16 %v165
    %v528 = vunpack.c.l.b16 %v166
    %v529 = vunpack.c.h.b16 %v166
    %v530 = vunpack.c.l.b16 %v167
    %v531 = vunpack.c.l.b16 %v168
    %v532 = vunpack.c.h.b16 %v168
    %v533 = vunpack.c.l.b16 %v169
    %v534 = vunpack.c.h.b16 %v169
    %v535 = vunpack.c.l.b16 %v170
    %v536 = vunpack.c.l.b16 %v171
    %v537 = vunpack.c.h.b16 %v171
    %v538 = vunpack.c.l.b16 %v172
    %v539 = vunpack.c.h.b16 %v172
    %v540 = vunpack.c.l.b16 %v173
    %v541 = vunpack.c.l.b16 %v174
    %v542 = vunpack.c.h.b16 %v174
    %v543 = vunpack.c.l.b16 %v175
    %v544 = vunpack.c.h.b16 %v175
    %v545 = vunpack.c.l.b16 %v176
    %v546 = vunpack.c.l.b16 %v177
    %v547 = vunpack.c.h.b16 %v177
    %v548 = vunpack.c.l.b16 %v178
    %v549 = vunpack.c.h.b16 %v178
    %v550 = vunpack.c.l.b16 %v179
    %v551 = vunpack.c.l.b16 %v180
    %v552 = vunpack.c.h.b16 %v180
    %v553 = vunpack.c.l.b16 %v181
    %v554 = vunpack.c.h.b16 %v181
    %v555 = vunpack.c.l.b16 %v182
    %v556 = vunpack.c.l.b16 %v183
    %v557 = vunpack.c.h.b16 %v183
    %v558 = vunpack.c.l.b16 %v184
    %v559 = vunpack.c.h.b16 %v184
    %v560 = vunpack.c.l.b16 %v185
    %v561 = vunpack.c.l.b16 %v186
    %v562 = vunpack.c.h.b16 %v186
    %v563 = vunpack.c.l.b16 %v187
    %v564 = vunpack.c.h.b16 %v187
    %v565 = vunpack.c.l.b16 %v188
    %v566 = vunpack.c.l.b16 %v189
    %v567 = vunpack.c.h.b16 %v189
    %v568 = vunpack.c.l.b16 %v190
    %v569 = vunpack.c.h.b16 %v190
    %v570 = vunpack.c.l.b16 %v191
    %v571 = vunpack.c.l.b16 %v192
    %v572 = vunpack.c.h.b16 %v192
    %v573 = vunpack.c.l.b16 %v193
    %v574 = vunpack.c.h.b16 %v193
    %v575 = vunpack.c.l.b16 %v194
    %v576 = vunpack.c.l.b16 %v195
    %v577 = vunpack.c.h.b16 %v195
    %v578 = vunpack.c.l.b16 %v196
    %v579 = vunpack.c.h.b16 %v196
    %v580 = vunpack.c.l.b16 %v197
    %v581 = vunpack.c.l.b16 %v198
    %v582 = vunpack.c.h.b16 %v198
    %v583 = vunpack.c.l.b16 %v199
    %v584 = vunpack.c.h.b16 %v199
    %v585 = vunpack.c.l.b16 %v200
    %v586 = vunpack.c.l.b16 %v201
    %v587 = vunpack.c.h.b16 %v201
    %v588 = vunpack.c.l.b16 %v202
    %v589 = vunpack.c.h.b16 %v202
    %v590 = vunpack.c.l.b16 %v203
    %v591 = vunpack.c.l.b16 %v204
    %v592 = vunpack.c.h.b16 %v204
    %v593 = vunpack.c.l.b16 %v205
    %v594 = vunpack.c.h.b16 %v205
    %v595 = vunpack.c.l.b16 %v206
    %v596 = vunpack.c.l.b16 %v207
    %v597 = vunpack.c.h.b16 %v207
    %v598 = vunpack.c.l.b16 %v208
    %v599 = vunpack.c.h.b16 %v208
    %v600 = vunpack.c.l.b16 %v209
    %v601 = vunpack.c.l.b16 %v210
    %v602 = vunpack.c.h.b16 %v210
    %v603 = vunpack.c.l.b16 %v211
    %v604 = vunpack.c.h.b16 %v211
    %v605 = vunpack.c.l.b16 %v212
    %v606 = vunpack.c.l.b16 %v213
    %v607 = vunpack.c.h.b16 %v213
    %v608 = vunpack.c.l.b16 %v214
    %v609 = vunpack.c.h.b16 %v214
    %v610 = vunpack.c.l.b16 %v215
    %v611 = vpack.c.b16 %v376, %v371
    %v612 = vpack.c.b16 %v377, %v372
    %v613 = vpack.c.b16 %v378, %v373
    %v614 = vpack.c.b16 %v379, %v374
    %v615 = vpack.c.b16 %v380, %v375
    %v616 = vpack.c.b16 %v386, %v381
    %v617 = vpack.c.b16 %v387, %v382
    %v618 = vpack.c.b16 %v388, %v383
    %v619 = vpack.c.b16 %v389, %v384
    %v620 = vpack.c.b16 %v390, %v385
    %v621 = vpack.c.b16 %v396, %v391
    %v622 = vpack.c.b16 %v397, %v392
    %v623 = vpack.c.b16 %v398, %v393
    %v624 = vpack.c.b16 %v399, %v394
    %v625 = vpack.c.b16 %v400, %v395
    %v626 = vpack.c.b16 %v406, %v401
    %v627 = vpack.c.b16 %v407, %v402
    %v628 = vpack.c.b16 %v408, %v403
    %v629 = vpack.c.b16 %v409, %v404
    %v630 = vpack.c.b16 %v410, %v405
    %v631 = vpack.c.b16 %v416, %v411
    %v632 = vpack.c.b16 %v417, %v412
    %v633 = vpack.c.b16 %v418, %v413
    %v634 = vpack.c.b16 %v419, %v414
    %v635 = vpack.c.b16 %v420, %v415
    %v636 = vpack.c.b16 %v426, %v421
    %v637 = vpack.c.b16 %v427, %v422
    %v638 = vpack.c.b16 %v428, %v423
    %v639 = vpack.c.b16 %v429, %v424
    %v640 = vpack.c.b16 %v430, %v425
    %v641 = vpack.c.b16 %v436, %v431
    %v642 = vpack.c.b16 %v437, %v432
    %v643 = vpack.c.b16 %v438, %v433
    %v644 = vpack.c.b16 %v439, %v434
    %v645 = vpack.c.b16 %v440, %v435
    %v646 = vpack.c.b16 %v446, %v441
    %v647 = vpack.c.b16 %v447, %v442
    %v648 = vpack.c.b16 %v448, %v443
    %v649 = vpack.c.b16 %v449, %v444
    %v650 = vpack.c.b16 %v450, %v445
    %v651 = vpack.c.b16 %v456, %v451
    %v652 = vpack.c.b16 %v457, %v452
    %v653 = vpack.c.b16 %v458, %v453
    %v654 = vpack.c.b16 %v459, %v454
    %v655 = vpack.c.b16 %v460, %v455
    %v656 = vpack.c.b16 %v466, %v461
    %v657 = vpack.c.b16 %v467, %v462
    %v658 = vpack.c.b16 %v468, %v463
    %v659 = vpack.c.b16 %v469, %v464
    %v660 = vpack.c.b16 %v470, %v465
    %v661 = vpack.c.b16 %v476, %v471
    %v662 = vpack.c.b16 %v477, %v472
    %v663 = vpack.c.b16 %v478, %v473
    %v664 = vpack.c.b16 %v479, %v474
    %v665 = vpack.c.b16 %v480, %v475
    %v666 = vpack.c.b16 %v486, %v481
    %v667 = vpack.c.b16 %v487, %v482
    %v668 = vpack.c.b16 %v488, %v483
    %v669 = vpack.c.b16 %v489, %v484
    %v670 = vpack.c.b16 %v490, %v485
    %v671 = vpack.c.b16 %v496, %v491
    %v672 = vpack.c.b16 %v497, %v492
    %v673 = vpack.c.b16 %v498, %v493
    %v674 = vpack.c.b16 %v499, %v494
    %v675 = vpack.c.b16 %v500, %v495
    %v676 = vpack.c.b16 %v506, %v501
    %v677 = vpack.c.b16 %v507, %v502
    %v678 = vpack.c.b16 %v508, %v503
    %v679 = vpack.c.b16 %v509, %v504
    %v680 = vpack.c.b16 %v510, %v505
    %v681 = vpack.c.b16 %v516, %v511
    %v682 = vpack.c.b16 %v517, %v512
    %v683 = vpack.c.b16 %v518, %v513
    %v684 = vpack.c.b16 %v519, %v514
    %v685 = vpack.c.b16 %v520, %v515
    %v686 = vpack.c.b16 %v526, %v521
    %v687 = vpack.c.b16 %v527, %v522
    %v688 = vpack.c.b16 %v528, %v523
    %v689 = vpack.c.b16 %v529, %v524
    %v690 = vpack.c.b16 %v530, %v525
    %v691 = vpack.c.b16 %v536, %v531
    %v692 = vpack.c.b16 %v537, %v532
    %v693 = vpack.c.b16 %v538, %v533
    %v694 = vpack.c.b16 %v539, %v534
    %v695 = vpack.c.b16 %v540, %v535
    %v696 = vpack.c.b16 %v546, %v541
    %v697 = vpack.c.b16 %v547, %v542
    %v698 = vpack.c.b16 %v548, %v543
    %v699 = vpack.c.b16 %v549, %v544
    %v700 = vpack.c.b16 %v550, %v545
    %v701 = vpack.c.b16 %v556, %v551
    %v702 = vpack.c.b16 %v557, %v552
    %v703 = vpack.c.b16 %v558, %v553
    %v704 = vpack.c.b16 %v559, %v554
    %v705 = vpack.c.b16 %v560, %v555
    %v706 = vpack.c.b16 %v566, %v561
    %v707 = vpack.c.b16 %v567, %v562
    %v708 = vpack.c.b16 %v568, %v563
    %v709 = vpack.c.b16 %v569, %v564
    %v710 = vpack.c.b16 %v570, %v565
    %v711 = vpack.c.b16 %v576, %v571
    %v712 = vpack.c.b16 %v577, %v572
    %v713 = vpack.c.b16 %v578, %v573
    %v714 = vpack.c.b16 %v579, %v574
    %v715 = vpack.c.b16 %v580, %v575
    %v716 = vpack.c.b16 %v586, %v581
    %v717 = vpack.c.b16 %v587, %v582
    %v718 = vpack.c.b16 %v588, %v583
    %v719 = vpack.c.b16 %v589, %v584
    %v720 = vpack.c.b16 %v590, %v585
    %v721 = vpack.c.b16 %v596, %v591
    %v722 = vpack.c.b16 %v597, %v592
    %v723 = vpack.c.b16 %v598, %v593
    %v724 = vpack.c.b16 %v599, %v594
    %v725 = vpack.c.b16 %v600, %v595
    %v726 = vpack.c.b16 %v606, %v601
    %v727 = vpack.c.b16 %v607, %v602
    %v728 = vpack.c.b16 %v608, %v603
    %v729 = vpack.c.b16 %v609, %v604
    %v730 = vpack.c.b16 %v610, %v605
    %851 = vmatprep.subr.bf16.mxu0 %v612
    %852 = vmatpush1.bf16.msra.mxu0 %v611
    %853 = vmatprep.subr.bf16.mxu0 %v617
    %854 = vmatpush1.bf16.msra.mxu0 %v616
    %855 = vmatprep.subr.bf16.mxu0 %v622
    %856 = vmatpush1.bf16.msra.mxu0 %v621
    %857 = vmatprep.subr.bf16.mxu0 %v627
    %858 = vmatpush1.bf16.msra.mxu0 %v626
    %859 = vmatprep.subr.bf16.mxu0 %v632
    %860 = vmatpush1.bf16.msra.mxu0 %v631
    %861 = vmatprep.subr.bf16.mxu0 %v637
    %862 = vmatpush1.bf16.msra.mxu0 %v636
    %863 = vmatprep.subr.bf16.mxu0 %v642
    %864 = vmatpush1.bf16.msra.mxu0 %v641
    %865 = vmatprep.subr.bf16.mxu0 %v647
    %866 = vmatpush1.bf16.msra.mxu0 %v646
    %867 = vmatprep.subr.bf16.mxu0 %v652
    %868 = vmatpush1.bf16.msra.mxu0 %v651
    %869 = vmatprep.subr.bf16.mxu0 %v657
    %870 = vmatpush1.bf16.msra.mxu0 %v656
    %871 = vmatprep.subr.bf16.mxu0 %v662
    %872 = vmatpush1.bf16.msra.mxu0 %v661
    %873 = vmatprep.subr.bf16.mxu0 %v667
    %874 = vmatpush1.bf16.msra.mxu0 %v666
    %875 = vmatprep.subr.bf16.mxu0 %v672
    %876 = vmatpush1.bf16.msra.mxu0 %v671
    %877 = vmatprep.subr.bf16.mxu0 %v677
    %878 = vmatpush1.bf16.msra.mxu0 %v676
    %879 = vmatprep.subr.bf16.mxu0 %v682
    %880 = vmatpush1.bf16.msra.mxu0 %v681
    %881 = vmatprep.subr.bf16.mxu0 %v687
    %882 = vmatpush1.bf16.msra.mxu0 %v686
    %883 = vmatprep.mubr.bf16.mxu0 %v222
    %884 = vmatmul.mubr.bf16.gmra.mrb[0].mxu0 %v221
    %v885 = vpop.f32.mrb[0].mxu0
    %v886 = vadd.f32 0.0, %v885
    %v887 = vpop.f32.mrb[0].mxu0
    %v888 = vadd.f32 0.0, %v887
    %v889 = vpop.f32.mrb[0].mxu0
    %v890 = vpop.f32.mrb[0].mxu0
    %891 = vdwg.mxu0
    %892 = vmatprep.subr.bf16.mxu0 %v692
    %893 = vmatpush1.bf16.msra.mxu0 %v691
    %894 = vmatprep.subr.bf16.mxu0 %v697
    %895 = vmatpush1.bf16.msra.mxu0 %v696
    %896 = vmatprep.subr.bf16.mxu0 %v702
    %897 = vmatpush1.bf16.msra.mxu0 %v701
    %898 = vmatprep.subr.bf16.mxu0 %v707
    %899 = vmatpush1.bf16.msra.mxu0 %v706
    %900 = vmatprep.subr.bf16.mxu0 %v712
    %901 = vmatpush1.bf16.msra.mxu0 %v711
    %902 = vmatprep.subr.bf16.mxu0 %v717
    %903 = vmatpush1.bf16.msra.mxu0 %v716
    %904 = vmatprep.subr.bf16.mxu0 %v722
    %905 = vmatpush1.bf16.msra.mxu0 %v721
    %906 = vmatprep.subr.bf16.mxu0 %v727
    %907 = vmatpush1.bf16.msra.mxu0 %v726
    %908 = vmatprep.subr.bf16.mxu0 0
    %909 = vmatpush1.bf16.msra.mxu0 0
    %910 = vmatprep.subr.bf16.mxu0 0
    %911 = vmatpush1.bf16.msra.mxu0 0
    %912 = vmatprep.subr.bf16.mxu0 0
    %913 = vmatpush1.bf16.msra.mxu0 0
    %914 = vmatprep.subr.bf16.mxu0 0
    %915 = vmatpush1.bf16.msra.mxu0 0
    %916 = vmatprep.subr.bf16.mxu0 0
    %917 = vmatpush1.bf16.msra.mxu0 0
    %918 = vmatprep.subr.bf16.mxu0 0
    %919 = vmatpush1.bf16.msra.mxu0 0
    %920 = vmatprep.subr.bf16.mxu0 0
    %921 = vmatpush1.bf16.msra.mxu0 0
    %922 = vmatprep.subr.bf16.mxu0 0
    %923 = vmatpush1.bf16.msra.mxu0 0
    %924 = vmatprep.mubr.bf16.mxu0 0
    %925 = vmatmul.mubr.bf16.gmra.mrb[0].mxu0 %v223
    %v926 = vpop.f32.mrb[0].mxu0
    %v927 = vadd.f32 %v886, %v926
    %v928 = vpop.f32.mrb[0].mxu0
    %v929 = vadd.f32 %v888, %v928
    %v930 = vpop.f32.mrb[0].mxu0
    %v931 = vpop.f32.mrb[0].mxu0
    %932 = vdwg.mxu0
    %933 = vmatprep.subr.bf16.mxu0 %v614
    %934 = vmatpush1.bf16.msra.mxu0 %v613
    %935 = vmatprep.subr.bf16.mxu0 %v619
    %936 = vmatpush1.bf16.msra.mxu0 %v618
    %937 = vmatprep.subr.bf16.mxu0 %v624
    %938 = vmatpush1.bf16.msra.mxu0 %v623
    %939 = vmatprep.subr.bf16.mxu0 %v629
    %940 = vmatpush1.bf16.msra.mxu0 %v628
    %941 = vmatprep.subr.bf16.mxu0 %v634
    %942 = vmatpush1.bf16.msra.mxu0 %v633
    %943 = vmatprep.subr.bf16.mxu0 %v639
    %944 = vmatpush1.bf16.msra.mxu0 %v638
    %945 = vmatprep.subr.bf16.mxu0 %v644
    %946 = vmatpush1.bf16.msra.mxu0 %v643
    %947 = vmatprep.subr.bf16.mxu0 %v649
    %948 = vmatpush1.bf16.msra.mxu0 %v648
    %949 = vmatprep.subr.bf16.mxu0 %v654
    %950 = vmatpush1.bf16.msra.mxu0 %v653
    %951 = vmatprep.subr.bf16.mxu0 %v659
    %952 = vmatpush1.bf16.msra.mxu0 %v658
    %953 = vmatprep.subr.bf16.mxu0 %v664
    %954 = vmatpush1.bf16.msra.mxu0 %v663
    %955 = vmatprep.subr.bf16.mxu0 %v669
    %956 = vmatpush1.bf16.msra.mxu0 %v668
    %957 = vmatprep.subr.bf16.mxu0 %v674
    %958 = vmatpush1.bf16.msra.mxu0 %v673
    %959 = vmatprep.subr.bf16.mxu0 %v679
    %960 = vmatpush1.bf16.msra.mxu0 %v678
    %961 = vmatprep.subr.bf16.mxu0 %v684
    %962 = vmatpush1.bf16.msra.mxu0 %v683
    %963 = vmatprep.subr.bf16.mxu0 %v689
    %964 = vmatpush1.bf16.msra.mxu0 %v688
    %965 = vmatprep.mubr.bf16.mxu0 %v222
    %966 = vmatmul.mubr.bf16.gmra.mrb[0].mxu0 %v221
    %v967 = vpop.f32.mrb[0].mxu0
    %v968 = vadd.f32 0.0, %v967
    %v969 = vpop.f32.mrb[0].mxu0
    %v970 = vadd.f32 0.0, %v969
    %v971 = vpop.f32.mrb[0].mxu0
    %v972 = vpop.f32.mrb[0].mxu0
    %973 = vdwg.mxu0
    %974 = vmatprep.subr.bf16.mxu0 %v694
    %975 = vmatpush1.bf16.msra.mxu0 %v693
    %976 = vmatprep.subr.bf16.mxu0 %v699
    %977 = vmatpush1.bf16.msra.mxu0 %v698
    %978 = vmatprep.subr.bf16.mxu0 %v704
    %979 = vmatpush1.bf16.msra.mxu0 %v703
    %980 = vmatprep.subr.bf16.mxu0 %v709
    %981 = vmatpush1.bf16.msra.mxu0 %v708
    %982 = vmatprep.subr.bf16.mxu0 %v714
    %983 = vmatpush1.bf16.msra.mxu0 %v713
    %984 = vmatprep.subr.bf16.mxu0 %v719
    %985 = vmatpush1.bf16.msra.mxu0 %v718
    %986 = vmatprep.subr.bf16.mxu0 %v724
    %987 = vmatpush1.bf16.msra.mxu0 %v723
    %988 = vmatprep.subr.bf16.mxu0 %v729
    %989 = vmatpush1.bf16.msra.mxu0 %v728
    %990 = vmatprep.subr.bf16.mxu0 0
    %991 = vmatpush1.bf16.msra.mxu0 0
    %992 = vmatprep.subr.bf16.mxu0 0
    %993 = vmatpush1.bf16.msra.mxu0 0
    %994 = vmatprep.subr.bf16.mxu0 0
    %995 = vmatpush1.bf16.msra.mxu0 0
    %996 = vmatprep.subr.bf16.mxu0 0
    %997 = vmatpush1.bf16.msra.mxu0 0
    %998 = vmatprep.subr.bf16.mxu0 0
    %999 = vmatpush1.bf16.msra.mxu0 0
    %1000 = vmatprep.subr.bf16.mxu0 0
    %1001 = vmatpush1.bf16.msra.mxu0 0
    %1002 = vmatprep.subr.bf16.mxu0 0
    %1003 = vmatpush1.bf16.msra.mxu0 0
    %1004 = vmatprep.subr.bf16.mxu0 0
    %1005 = vmatpush1.bf16.msra.mxu0 0
    %1006 = vmatprep.mubr.bf16.mxu0 0
    %1007 = vmatmul.mubr.bf16.gmra.mrb[0].mxu0 %v223
    %v1008 = vpop.f32.mrb[0].mxu0
    %v1009 = vadd.f32 %v968, %v1008
    %v1010 = vpop.f32.mrb[0].mxu0
    %v1011 = vadd.f32 %v970, %v1010
    %v1012 = vpop.f32.mrb[0].mxu0
    %v1013 = vpop.f32.mrb[0].mxu0
    %1014 = vdwg.mxu0
    %1015 = vmatprep.subr.bf16.mxu0 0
    %1016 = vmatpush1.bf16.msra.mxu0 %v615
    %1017 = vmatprep.subr.bf16.mxu0 0
    %1018 = vmatpush1.bf16.msra.mxu0 %v620
    %1019 = vmatprep.subr.bf16.mxu0 0
    %1020 = vmatpush1.bf16.msra.mxu0 %v625
    %1021 = vmatprep.subr.bf16.mxu0 0
    %1022 = vmatpush1.bf16.msra.mxu0 %v630
    %1023 = vmatprep.subr.bf16.mxu0 0
    %1024 = vmatpush1.bf16.msra.mxu0 %v635
    %1025 = vmatprep.subr.bf16.mxu0 0
    %1026 = vmatpush1.bf16.msra.mxu0 %v640
    %1027 = vmatprep.subr.bf16.mxu0 0
    %1028 = vmatpush1.bf16.msra.mxu0 %v645
    %1029 = vmatprep.subr.bf16.mxu0 0
    %1030 = vmatpush1.bf16.msra.mxu0 %v650
    %1031 = vmatprep.subr.bf16.mxu0 0
    %1032 = vmatpush1.bf16.msra.mxu0 %v655
    %1033 = vmatprep.subr.bf16.mxu0 0
    %1034 = vmatpush1.bf16.msra.mxu0 %v660
    %1035 = vmatprep.subr.bf16.mxu0 0
    %1036 = vmatpush1.bf16.msra.mxu0 %v665
    %1037 = vmatprep.subr.bf16.mxu0 0
    %1038 = vmatpush1.bf16.msra.mxu0 %v670
    %1039 = vmatprep.subr.bf16.mxu0 0
    %1040 = vmatpush1.bf16.msra.mxu0 %v675
    %1041 = vmatprep.subr.bf16.mxu0 0
    %1042 = vmatpush1.bf16.msra.mxu0 %v680
    %1043 = vmatprep.subr.bf16.mxu0 0
    %1044 = vmatpush1.bf16.msra.mxu0 %v685
    %1045 = vmatprep.subr.bf16.mxu0 0
    %1046 = vmatpush1.bf16.msra.mxu0 %v690
    %1047 = vmatprep.mubr.bf16.mxu0 %v222
    %1048 = vmatmul.mubr.bf16.gmra.mrb[0].mxu0 %v221
    %v1049 = vpop.f32.mrb[0].mxu0
    %v1050 = vadd.f32 0.0, %v1049
    %v1051 = vpop.f32.mrb[0].mxu0
    %v1052 = vpop.f32.mrb[0].mxu0
    %v1053 = vpop.f32.mrb[0].mxu0
    %1054 = vdwg.mxu0
    %1055 = vmatprep.subr.bf16.mxu0 0
    %1056 = vmatpush1.bf16.msra.mxu0 %v695
    %1057 = vmatprep.subr.bf16.mxu0 0
    %1058 = vmatpush1.bf16.msra.mxu0 %v700
    %1059 = vmatprep.subr.bf16.mxu0 0
    %1060 = vmatpush1.bf16.msra.mxu0 %v705
    %1061 = vmatprep.subr.bf16.mxu0 0
    %1062 = vmatpush1.bf16.msra.mxu0 %v710
    %1063 = vmatprep.subr.bf16.mxu0 0
    %1064 = vmatpush1.bf16.msra.mxu0 %v715
    %1065 = vmatprep.subr.bf16.mxu0 0
    %1066 = vmatpush1.bf16.msra.mxu0 %v720
    %1067 = vmatprep.subr.bf16.mxu0 0
    %1068 = vmatpush1.bf16.msra.mxu0 %v725
    %1069 = vmatprep.subr.bf16.mxu0 0
    %1070 = vmatpush1.bf16.msra.mxu0 %v730
    %1071 = vmatprep.subr.bf16.mxu0 0
    %1072 = vmatpush1.bf16.msra.mxu0 0
    %1073 = vmatprep.subr.bf16.mxu0 0
    %1074 = vmatpush1.bf16.msra.mxu0 0
    %1075 = vmatprep.subr.bf16.mxu0 0
    %1076 = vmatpush1.bf16.msra.mxu0 0
    %1077 = vmatprep.subr.bf16.mxu0 0
    %1078 = vmatpush1.bf16.msra.mxu0 0
    %1079 = vmatprep.subr.bf16.mxu0 0
    %1080 = vmatpush1.bf16.msra.mxu0 0
    %1081 = vmatprep.subr.bf16.mxu0 0
    %1082 = vmatpush1.bf16.msra.mxu0 0
    %1083 = vmatprep.subr.bf16.mxu0 0
    %1084 = vmatpush1.bf16.msra.mxu0 0
    %1085 = vmatprep.subr.bf16.mxu0 0
    %1086 = vmatpush1.bf16.msra.mxu0 0
    %1087 = vmatprep.mubr.bf16.mxu0 0
    %1088 = vmatmul.mubr.bf16.gmra.mrb[0].mxu0 %v223
    %v1089 = vpop.f32.mrb[0].mxu0
    %v1090 = vadd.f32 %v1050, %v1089
    %v1091 = vpop.f32.mrb[0].mxu0
    %v1092 = vpop.f32.mrb[0].mxu0
    %v1093 = vpop.f32.mrb[0].mxu0
    %1094 = vdwg.mxu0
    %v1095 = vadd.f32 %v65, %v927
    %v1096 = vadd.f32 %v66, %v929
    %v1097 = vadd.f32 %v67, %v1009
    %v1098 = vadd.f32 %v68, %v1011
    %v1099 = vadd.f32 %v69, %v1090
    %1100 = vst [vmem:[#allocation2] sm:$0xff] %v1095
    %1101 = vst [vmem:[#allocation2 + $0x8] sm:$0xff] %v1096
    %1102 = vst [vmem:[#allocation2 + $0x10] sm:$0xff] %v1097
    %1103 = vst [vmem:[#allocation2 + $0x18] sm:$0xff] %v1098
    %1104 = vst [vmem:[#allocation2 + $0x20] sm:$0xff] %v1099
    // Predicated region
    $region34: #{tpu_custom_call.1} parent=1 // pred_check
      %p1105 = pneg %p56
    $region35: #{tpu_custom_call.1} parent=1 // pred_check_branch
      %1107 = sbr.rel (%p1105) target = $region37
    $region36: #{tpu_custom_call.1} parent=1 // pred_region
      %v1108 = vld [vmem:[#allocation2] sm:$0xff]
      %v1109 = vld [vmem:[#allocation2 + $0x8] sm:$0xff]
      %v1110 = vld [vmem:[#allocation2 + $0x10] sm:$0xff]
      %v1111 = vld [vmem:[#allocation2 + $0x18] sm:$0xff]
      %v1112 = vld [vmem:[#allocation2 + $0x20] sm:$0xff]
      %v1113 = vld [vmem:[%s3] sm:$0x1f]
      %v1115 = vlaneseq
      %v1116 = vshrl.u32 %v1115, 7
      %v1117 = vsub.s32 0, %v1116
      %v1118 = vrot.slane %v1113, %v1117
      %v1119 = vlaneseq
      %v1120 = vshrl.u32 %v1119, 7
      %v1121 = vsub.s32 1, %v1120
      %v1122 = vrot.slane %v1113, %v1121
      %v1123 = vlaneseq
      %v1124 = vshrl.u32 %v1123, 7
      %v1125 = vsub.s32 2, %v1124
      %v1126 = vrot.slane %v1113, %v1125
      %v1127 = vlaneseq
      %v1128 = vshrl.u32 %v1127, 7
      %v1129 = vsub.s32 3, %v1128
      %v1130 = vrot.slane %v1113, %v1129
      %v1131 = vlaneseq
      %v1132 = vshrl.u32 %v1131, 7
      %v1133 = vsub.s32 4, %v1132
      %v1134 = vrot.slane %v1113, %v1133
      %v1140 = vadd.f32 %v1108, %v1118
      %v1141 = vadd.f32 %v1109, %v1122
      %v1142 = vadd.f32 %v1110, %v1126
      %v1143 = vadd.f32 %v1111, %v1130
      %v1144 = vadd.f32 %v1112, %v1134
      %v1145 = vmul.f32 %v1140, 0.5
      %v1146 = vtanh.pop %v1145
      %v1147 = vmul.f32 %v1146, 0.5
      %v1148 = vadd.f32 %v1147, 0.5
      %v1149 = vmul.f32 %v1141, 0.5
      %v1150 = vtanh.pop %v1149
      %v1151 = vmul.f32 %v1150, 0.5
      %v1152 = vadd.f32 %v1151, 0.5
      %v1153 = vtanh.pop %v1142
      %v1154 = vmul.f32 %v1143, 0.5
      %v1155 = vmul.f32 %v1144, 0.5
      %v1156 = vtanh.pop %v1154
      %v1157 = vtanh.pop %v1155
      %v1158 = vmul.f32 %v1156, 0.5
      %v1159 = vmul.f32 %v1157, 0.5
      %v1160 = vadd.f32 %v1158, 0.5
      %v1161 = vadd.f32 %v1159, 0.5
      %v1162 = vld [vmem:[#allocation6] sm:$0xff]
      %v1163 = vld [vmem:[#allocation6 + $0x8] sm:$0xff]
      %v1164 = vmul.f32 %v1160, %v1162
      %v1165 = vmul.f32 %v1161, %v1163
      %v1166 = vadd.f32 %v1164, %v1165
      %v1167 = vmul.f32 %v1148, %v1153
      %v1168 = vadd.f32 %v1167, %v1166
      %v1169 = vtanh.pop %v1168
      %v1170 = vmul.f32 %v1152, %v1169
      %1171 = vst [vmem:[#allocation9] sm:$0xff] %v1170
      %1172 = vst [vmem:[#allocation9 + $0x8] sm:$0xff] %v1168
    $region37: #{tpu_custom_call.1} parent=1 // pred_fallthru
      _
    // Predicated region
    $region38: #{tpu_custom_call.1} parent=1 // pred_check
      _
    $region39: #{tpu_custom_call.1} parent=1 // pred_check_branch
      %1174 = sbr.rel (0) target = $region41
    $region40: #{tpu_custom_call.1} parent=1 // pred_region
      %s1176 = ssub.s32 256, 256
      %1177 = vsyncadd [#allocation5], %s1176
      %s1179 = sshll.u32 [#allocation9], 4
      %s1180 = int_to_ptr.vmem [resolvable:$true] %s1179
      %1182 = dma.vmem_to_hbm [thread:$0]  %s1180, 256, %s4, [#allocation5]
    $region41: #{tpu_custom_call.1} parent=1 // pred_fallthru
      _
    // Predicated region
    $region42: #{tpu_custom_call.1} parent=1 // pred_check
      _
    $region43: #{tpu_custom_call.1} parent=1 // pred_check_branch
      %1184 = sbr.rel (0) target = $region45
    $region44: #{tpu_custom_call.1} parent=1 // pred_region
      %1185 = dma.done [#allocation5], 256
    $region45: #{tpu_custom_call.1} parent=1 // pred_fallthru
      _
    %1186 = vsyncpa [#allocation4], 1
    %1187 = vsyncpa [#allocation7], 1
    %1188 = vsyncpa [#allocation5], 1

</llo_original>
